<compile_context>
chip_gen: v7x
topology: tpu7x:2x2x1
jax: 0.10.0
libtpu: 0.0.40
codegen_flags: <defaults>
</compile_context>

<pallas_src>
import jax
import jax.numpy as jnp
from jax import lax
from jax.experimental import pallas as pl
from jax.experimental.pallas import tpu as pltpu

_MIB = 1 << 20


def _round_up(x, m):
    return ((x + m - 1) // m) * m


def _pick_block(dim, align, target):
    """Largest d <= target with d | dim and align | d; else the full dim."""
    for d in range(min(dim, target), 0, -1):
        if dim % d == 0 and d % align == 0:
            return d
    return dim


def _divisor_leq(n, cap):
    for d in range(min(cap, n), 0, -1):
        if n % d == 0:
            return d
    return 1


def _vmem_params(est_bytes, dims):
    # Explicit scoped-VMEM limit: >= 32 MiB (above v5e's 16 MiB default), capped at
    # v7x's 64 MiB physical VMEM.  Tile derivation keeps usage well under this.
    limit = int(min(max(est_bytes * 2, 32 * _MIB), 64 * _MIB))
    return pltpu.CompilerParams(dimension_semantics=dims, vmem_limit_bytes=limit)


# ----------------------------- LSTM recurrence kernel (fused projection) ----
def lstm_kernel(embed_ref, w_ih_ref, w_hh_ref, bias_ref, h0_ref, c0_ref,
                out_ref, hN_ref, cN_ref, h_sc, c_sc):
    g = pl.program_id(1)                         # time-chunk axis (sequential)

    @pl.when(g == 0)
    def _():
        h_sc[...] = h0_ref[...]
        c_sc[...] = c0_ref[...]

    Bb, Hp = h_sc.shape
    Tc = out_ref.shape[0]

    # Hoist weight loads and the bias broadcast out of the recurrence
    # (broadcast_in_dim is not CSE'd per-iteration).
    w_ih = w_ih_ref[...]                         # (E, 4Hp) bf16
    w_hh = w_hh_ref[...]                         # (Hp, 4Hp) bf16
    bias = jnp.broadcast_to(bias_ref[...], (Bb, 4 * Hp))

    def step(s, carry):
        h = h_sc[...]
        c = c_sc[...]
        # Fused input projection: two MXU pushes per step, bf16 operands,
        # f32 accumulation.  No HBM round-trip for the projected gates.
        gates = (jnp.dot(embed_ref[s], w_ih, preferred_element_type=jnp.float32)
                 + jnp.dot(h.astype(jnp.bfloat16), w_hh,
                           preferred_element_type=jnp.float32)
                 + bias)
        # Lane-aligned per-gate slices (each gate block padded to Hp lanes);
        # activation applied immediately after each slice to shorten live ranges.
        i_g = jax.nn.sigmoid(gates[:, 0 * Hp:1 * Hp])
        f_g = jax.nn.sigmoid(gates[:, 1 * Hp:2 * Hp])
        g_g = jnp.tanh(gates[:, 2 * Hp:3 * Hp])
        o_g = jax.nn.sigmoid(gates[:, 3 * Hp:4 * Hp])

        c_new = f_g * c + i_g * g_g
        h_new = o_g * jnp.tanh(c_new)

        h_sc[...] = h_new
        c_sc[...] = c_new
        out_ref[s] = h_new.astype(out_ref.dtype)   # bf16 store: halves HBM/vst bytes
        return carry

    unroll = Tc if Tc <= 8 else 4                  # bounded unroll (regalloc pressure)
    lax.fori_loop(0, Tc, step, None, unroll=unroll)

    @pl.when(g == pl.num_programs(1) - 1)
    def _():
        hN_ref[...] = h_sc[...]
        cN_ref[...] = c_sc[...]


def lstm_forward(embed_tm, w_ih_pad, w_hh_pad, bias_pad, h0_pad, c0_pad,
                 *, tc_cap=16, vmem_budget=40 * _MIB):
    """embed_tm: (T, B, E) bf16 time-major embeddings.
       Returns (out_tm (T, B, Hp) bf16, hN (B, Hp) f32, cN (B, Hp) f32)."""
    T, B, E = embed_tm.shape
    Hp = h0_pad.shape[1]
    G = 4 * Hp

    # v7x has 2 TensorCores: split the batch across a parallel grid axis when the
    # halves stay (8,128)-aligned; on v5e/v6e this axis just runs sequentially.
    Bb = B // 2 if (B % 2 == 0 and (B // 2) % 8 == 0) else B
    nb = B // Bb

    def est(tc):
        e = 0
        e += 2 * tc * Bb * E * 2          # embed chunk (bf16, double-buffered)
        e += 2 * tc * Bb * Hp * 2         # out chunk (bf16, double-buffered)
        e += 2 * E * G * 2                # W_ih (bf16)
        e += 2 * Hp * G * 2               # W_hh (bf16)
        e += 2 * G * 4                    # bias
        e += 8 * Bb * Hp * 4              # h0 / c0 / hN / cN blocks
        e += 2 * Bb * Hp * 4              # h / c carry scratch
        return e

    Tc = _divisor_leq(T, tc_cap)
    while Tc > 1 and est(Tc) > vmem_budget:   # re-derive Tc against the VMEM budget
        Tc = _divisor_leq(T, Tc - 1)

    grid_spec = pltpu.PrefetchScalarGridSpec(
        num_scalar_prefetch=0,
        grid=(nb, T // Tc),
        in_specs=[
            pl.BlockSpec((Tc, Bb, E), lambda bb, g: (g, bb, 0)),   # embeddings chunk
            pl.BlockSpec((E, G), lambda bb, g: (0, 0)),            # W_ih^T (padded, bf16)
            pl.BlockSpec((Hp, G), lambda bb, g: (0, 0)),           # W_hh^T (padded, bf16)
            pl.BlockSpec((1, G), lambda bb, g: (0, 0)),            # bias (f32)
            pl.BlockSpec((Bb, Hp), lambda bb, g: (bb, 0)),         # h0
            pl.BlockSpec((Bb, Hp), lambda bb, g: (bb, 0)),         # c0
        ],
        out_specs=[
            pl.BlockSpec((Tc, Bb, Hp), lambda bb, g: (g, bb, 0)),  # per-step hidden (bf16)
            pl.BlockSpec((Bb, Hp), lambda bb, g: (bb, 0)),         # h_N
            pl.BlockSpec((Bb, Hp), lambda bb, g: (bb, 0)),         # c_N
        ],
        scratch_shapes=[
            pltpu.VMEM((Bb, Hp), jnp.float32),                     # h carry
            pltpu.VMEM((Bb, Hp), jnp.float32),                     # c carry
        ],
    )

    out_shapes = (
        jax.ShapeDtypeStruct((T, B, Hp), jnp.bfloat16),
        jax.ShapeDtypeStruct((B, Hp), jnp.float32),
        jax.ShapeDtypeStruct((B, Hp), jnp.float32),
    )

    return pl.pallas_call(
        lstm_kernel,
        out_shape=out_shapes,
        grid_spec=grid_spec,
        compiler_params=_vmem_params(est(Tc), ("parallel", "arbitrary")),
    )(embed_tm, w_ih_pad, w_hh_pad, bias_pad, h0_pad, c0_pad)


# ----------------------------- Dense head (batch-first logits) --------------
def head_kernel(x_ref, w_ref, b_ref, o_ref):
    # x_ref: (tt, tb, Hp) bf16 (time-major LSTM output block)
    # o_ref: (tb, tt, tv) f32  (batch-first logits block)
    # The batch-first layout comes from the out_spec index map; the per-timestep
    # row stores avoid any full-tensor HBM transpose of the logits.
    tt = x_ref.shape[0]
    tb = x_ref.shape[1]
    w = w_ref[...]
    b = jnp.broadcast_to(b_ref[...], (tb, w.shape[1]))
    for t in range(tt):          # static, small; head is HBM / weight-stream bound
        o_ref[:, t, :] = (jnp.dot(x_ref[t], w, preferred_element_type=jnp.float32)
                          + b)


def head_forward(out_tm, w_pad, b_pad, *, tv_target=512, row_target=512):
    """out_tm: (T, B, Hp) bf16 ; w_pad: (Hp, Vp) bf16 ; b_pad: (1, Vp) f32
       Returns logits (B, T, Vp) f32 (batch-first)."""
    T, B, Hp = out_tm.shape
    Vp = w_pad.shape[1]

    tb = _pick_block(B, 8, 64)                              # full B at toy sizes
    tt = _pick_block(T, 8, max(8, row_target // max(tb, 1)))
    tv = _pick_block(Vp, 128, tv_target)                    # lane-dense vocab tiles

    est = (2 * tt * tb * Hp * 2      # x block (bf16, double-buffered)
           + 2 * Hp * tv * 2         # weight block (bf16)
           + 2 * tv * 4              # bias block
           + 2 * tb * tt * tv * 4)   # output block (f32)

    grid_spec = pltpu.PrefetchScalarGridSpec(
        num_scalar_prefetch=0,
        # Vocab tiles outermost: the (large) weight streams from HBM only once;
        # the (small) activation blocks are re-streamed instead.
        grid=(Vp // tv, B // tb, T // tt),
        in_specs=[
            pl.BlockSpec((tt, tb, Hp), lambda j, b, t: (t, b, 0)),
            pl.BlockSpec((Hp, tv), lambda j, b, t: (0, j)),
            pl.BlockSpec((1, tv), lambda j, b, t: (0, j)),
        ],
        out_specs=pl.BlockSpec((tb, tt, tv), lambda j, b, t: (b, t, j)),
    )

    return pl.pallas_call(
        head_kernel,
        out_shape=jax.ShapeDtypeStruct((B, T, Vp), jnp.float32),
        grid_spec=grid_spec,
        compiler_params=_vmem_params(est, ("parallel", "parallel", "parallel")),
    )(out_tm, w_pad, b_pad)


# ----------------------------- Module wrapper --------------------------------
class RNNModulePallas:
    def __init__(self, n_vocab, seq_size, embedding_size, lstm_size, key):
        self.n_vocab = n_vocab
        self.seq_size = seq_size
        self.embedding_size = embedding_size
        self.lstm_size = lstm_size

        ks = jax.random.split(key, 7)
        H, E, V = lstm_size, embedding_size, n_vocab
        # Deterministic synthetic parameters (shapes match the PyTorch module).
        self.embedding = jax.random.normal(ks[0], (V, E), jnp.float32) * 0.1
        self.w_ih = jax.random.normal(ks[1], (4 * H, E), jnp.float32) * 0.1
        self.w_hh = jax.random.normal(ks[2], (4 * H, H), jnp.float32) * 0.1
        self.b_ih = jax.random.normal(ks[3], (4 * H,), jnp.float32) * 0.1
        self.b_hh = jax.random.normal(ks[4], (4 * H,), jnp.float32) * 0.1
        self.dense_w = jax.random.normal(ks[5], (V, H), jnp.float32) * 0.1
        self.dense_b = jax.random.normal(ks[6], (V,), jnp.float32) * 0.1

        Hp = _round_up(H, 128)           # lane-aligned per-gate hidden padding
        Vp = _round_up(V, 128)           # lane-aligned vocab padding (head tiles)
        self.Hp, self.Vp = Hp, Vp

        # bf16 embedding table: the gather emits bf16 activations that feed the
        # fused projection directly (halves activation-side HBM/DMA bytes).
        self.embedding_bf16 = self.embedding.astype(jnp.bfloat16)

        w_ih_t = self.w_ih.T                        # (E, 4H)
        w_hh_t = self.w_hh.T                        # (H, 4H)
        bias = self.b_ih + self.b_hh                # (4H,)

        w_ih_pad = jnp.zeros((E, 4 * Hp), jnp.float32)
        w_hh_pad = jnp.zeros((Hp, 4 * Hp), jnp.float32)
        bias_pad = jnp.zeros((1, 4 * Hp), jnp.float32)
        for k in range(4):
            w_ih_pad = w_ih_pad.at[:, k * Hp:k * Hp + H].set(w_ih_t[:, k * H:(k + 1) * H])
            w_hh_pad = w_hh_pad.at[:H, k * Hp:k * Hp + H].set(w_hh_t[:, k * H:(k + 1) * H])
            bias_pad = bias_pad.at[0, k * Hp:k * Hp + H].set(bias[k * H:(k + 1) * H])

        self.w_ih_pad_bf16 = w_ih_pad.astype(jnp.bfloat16)   # (E, 4Hp)
        self.w_hh_pad_bf16 = w_hh_pad.astype(jnp.bfloat16)   # (Hp, 4Hp)
        self.bias_pad = bias_pad                              # (1, 4Hp) f32

        dense_w_pad = jnp.zeros((Hp, Vp), jnp.float32).at[:H, :V].set(self.dense_w.T)
        self.dense_w_pad_bf16 = dense_w_pad.astype(jnp.bfloat16)            # (Hp, Vp)
        self.dense_b_pad = jnp.zeros((1, Vp), jnp.float32).at[0, :V].set(self.dense_b)

    def zero_state(self, batch_size):
        return (jnp.zeros((1, batch_size, self.lstm_size), jnp.float32),
                jnp.zeros((1, batch_size, self.lstm_size), jnp.float32))

    def __call__(self, x, prev_state):
        # x: (B, T) int32 token ids ; prev_state: ((1,B,H), (1,B,H))
        B, T = x.shape
        H, Hp, V, Vp = self.lstm_size, self.Hp, self.n_vocab, self.Vp

        # TODO(synk): embedding gather stays as XLA glue (no clean Pallas gather
        # path here); it is done time-major and in bf16 so it feeds the fused
        # projection+LSTM kernel directly with no HBM relayout.
        embed_tm = jnp.take(self.embedding_bf16, x.T, axis=0)      # (T, B, E) bf16

        # Zero-padded initial state (padded lanes provably stay zero through time).
        h0p = jnp.zeros((B, Hp), jnp.float32).at[:, :H].set(prev_state[0][0])
        c0p = jnp.zeros((B, Hp), jnp.float32).at[:, :H].set(prev_state[1][0])

        out_tm, hN, cN = lstm_forward(embed_tm, self.w_ih_pad_bf16,
                                      self.w_hh_pad_bf16, self.bias_pad, h0p, c0p)

        # Dense head emits batch-first logits directly; only slice off vocab padding.
        logits_p = head_forward(out_tm, self.dense_w_pad_bf16, self.dense_b_pad)
        logits = logits_p[:, :, :V] if Vp != V else logits_p        # (B, T, V)

        state = (hN[:, :H][None, ...], cN[:, :H][None, ...])        # (1, B, H) each
        return logits, state


# ----------------------------- Pure-JAX reference -----------------------------
def _reference_forward(model, x, prev_state):
    emb = jnp.take(model.embedding, x, axis=0)                      # (B, T, E) f32
    H = model.lstm_size
    b = model.b_ih + model.b_hh
    h = prev_state[0][0]
    c = prev_state[1][0]
    outs = []
    for t in range(x.shape[1]):
        gates = emb[:, t, :] @ model.w_ih.T + h @ model.w_hh.T + b
        i = jax.nn.sigmoid(gates[:, 0 * H:1 * H])
        f = jax.nn.sigmoid(gates[:, 1 * H:2 * H])
        g = jnp.tanh(gates[:, 2 * H:3 * H])
        o = jax.nn.sigmoid(gates[:, 3 * H:4 * H])
        c = f * c + i * g
        h = o * jnp.tanh(c)
        outs.append(h)
    out = jnp.stack(outs, axis=1)                                   # (B, T, H)
    logits = out @ model.dense_w.T + model.dense_b
    return logits, (h[None], c[None])


# --------------------------------- Main ---------------------------------------
if __name__ == "__main__":
    n_vocab = 32
    seq_size = 8
    embedding_size = 16
    lstm_size = 32
    batch = 2

    key = jax.random.PRNGKey(0)
    k_params, k_tok = jax.random.split(key)

    model = RNNModulePallas(n_vocab, seq_size, embedding_size, lstm_size, k_params)

    x = jax.random.randint(k_tok, (batch, seq_size), 0, n_vocab, dtype=jnp.int32)
    prev_state = model.zero_state(batch)

    logits, (h_n, c_n) = model(x, prev_state)
    jax.block_until_ready((logits, h_n, c_n))

    assert logits.shape == (batch, seq_size, n_vocab)
    assert h_n.shape == (1, batch, lstm_size)
    assert c_n.shape == (1, batch, lstm_size)

    # Numerical check vs. a float32 pure-JAX reference (bf16 operands -> loose tol).
    ref_logits, (ref_h, ref_c) = _reference_forward(model, x, prev_state)
    assert jnp.allclose(logits, ref_logits, atol=3e-2, rtol=3e-2), \
        float(jnp.max(jnp.abs(logits - ref_logits)))
    assert jnp.allclose(h_n, ref_h, atol=3e-2, rtol=3e-2)
    assert jnp.allclose(c_n, ref_c, atol=3e-2, rtol=3e-2)

    print("KERNEL_OK")
</pallas_src>

<mosaic_0001>
module attributes {stable_mosaic.version = 11 : i64} {
  func.func @lstm_kernel(%arg0: i32, %arg1: i32, %arg2: memref<8x2x16xbf16, #tpu.memory_space<vmem>>, %arg3: memref<16x512xbf16, #tpu.memory_space<vmem>>, %arg4: memref<128x512xbf16, #tpu.memory_space<vmem>>, %arg5: memref<1x512xf32, #tpu.memory_space<vmem>>, %arg6: memref<2x128xf32, #tpu.memory_space<vmem>>, %arg7: memref<2x128xf32, #tpu.memory_space<vmem>>, %arg8: memref<8x2x128xbf16, #tpu.memory_space<vmem>>, %arg9: memref<2x128xf32, #tpu.memory_space<vmem>>, %arg10: memref<2x128xf32, #tpu.memory_space<vmem>>, %arg11: memref<2x128xf32, #tpu.memory_space<vmem>>, %arg12: memref<2x128xf32, #tpu.memory_space<vmem>>) attributes {dimension_semantics = [#tpu.dimension_semantics<parallel>, #tpu.dimension_semantics<arbitrary>], iteration_bounds = array<i64: 1, 1>, scalar_prefetch = 0 : i64, scratch_operands = 2 : i64, tpu.core_type = #tpu.core_type<tc>, window_params = [{transform_indices = @transform_0, window_bounds = array<i64: 8, 2, 16>}, {pipeline_mode = #tpu.pipeline_mode<synchronous>, transform_indices = @transform_1, window_bounds = array<i64: 16, 512>}, {pipeline_mode = #tpu.pipeline_mode<synchronous>, transform_indices = @transform_2, window_bounds = array<i64: 128, 512>}, {pipeline_mode = #tpu.pipeline_mode<synchronous>, transform_indices = @transform_3, window_bounds = array<i64: 1, 512>}, {transform_indices = @transform_4, window_bounds = array<i64: 2, 128>}, {transform_indices = @transform_5, window_bounds = array<i64: 2, 128>}, {transform_indices = @transform_6, window_bounds = array<i64: 8, 2, 128>}, {transform_indices = @transform_7, window_bounds = array<i64: 2, 128>}, {transform_indices = @transform_8, window_bounds = array<i64: 2, 128>}]} {
    %c0_i32 = arith.constant 0 : i32
    %0 = arith.cmpi eq, %arg1, %c0_i32 : i32
    %1 = arith.extui %0 : i1 to i32
    %c0_i32_0 = arith.constant 0 : i32
    %2 = arith.cmpi ne, %1, %c0_i32_0 : i32
    scf.if %2 {
      %c0_144 = arith.constant 0 : index
      %c0_145 = arith.constant 0 : index
      %347 = vector.load %arg6[%c0_144, %c0_145] : memref<2x128xf32, #tpu.memory_space<vmem>>, vector<2x128xf32>
      %c0_146 = arith.constant 0 : index
      %c0_147 = arith.constant 0 : index
      %348 = vector.load %arg11[%c0_146, %c0_147] : memref<2x128xf32, #tpu.memory_space<vmem>>, vector<2x128xf32>
      tpu.vector_store %arg11[%c0_146, %c0_147], %347 {strides = array<i32>} : memref<2x128xf32, #tpu.memory_space<vmem>>, vector<2x128xf32>,
      %c0_148 = arith.constant 0 : index
      %c0_149 = arith.constant 0 : index
      %349 = vector.load %arg7[%c0_148, %c0_149] : memref<2x128xf32, #tpu.memory_space<vmem>>, vector<2x128xf32>
      %c0_150 = arith.constant 0 : index
      %c0_151 = arith.constant 0 : index
      %350 = vector.load %arg12[%c0_150, %c0_151] : memref<2x128xf32, #tpu.memory_space<vmem>>, vector<2x128xf32>
      tpu.vector_store %arg12[%c0_150, %c0_151], %349 {strides = array<i32>} : memref<2x128xf32, #tpu.memory_space<vmem>>, vector<2x128xf32>,
    } else {
    }
    %c0 = arith.constant 0 : index
    %c0_1 = arith.constant 0 : index
    %3 = vector.load %arg3[%c0, %c0_1] : memref<16x512xbf16, #tpu.memory_space<vmem>>, vector<16x512xbf16>
    %c0_2 = arith.constant 0 : index
    %c0_3 = arith.constant 0 : index
    %4 = vector.load %arg4[%c0_2, %c0_3] : memref<128x512xbf16, #tpu.memory_space<vmem>>, vector<128x512xbf16>
    %c0_4 = arith.constant 0 : index
    %c0_5 = arith.constant 0 : index
    %5 = vector.load %arg5[%c0_4, %c0_5] : memref<1x512xf32, #tpu.memory_space<vmem>>, vector<1x512xf32>
    %6 = vector.shape_cast %5 : vector<1x512xf32> to vector<1x512xf32>
    %7 = vector.broadcast %6 : vector<1x512xf32> to vector<2x512xf32>
    %c0_i32_6 = arith.constant 0 : i32
    %c0_7 = arith.constant 0 : index
    %c0_8 = arith.constant 0 : index
    %8 = vector.load %arg11[%c0_7, %c0_8] : memref<2x128xf32, #tpu.memory_space<vmem>>, vector<2x128xf32>
    %c0_9 = arith.constant 0 : index
    %c0_10 = arith.constant 0 : index
    %9 = vector.load %arg12[%c0_9, %c0_10] : memref<2x128xf32, #tpu.memory_space<vmem>>, vector<2x128xf32>
    %10 = arith.index_cast %c0_i32_6 : i32 to index
    %c0_11 = arith.constant 0 : index
    %c0_12 = arith.constant 0 : index
    %11 = vector.load %arg2[%10, %c0_11, %c0_12] : memref<8x2x16xbf16, #tpu.memory_space<vmem>>, vector<1x2x16xbf16>
    %12 = vector.shape_cast %11 : vector<1x2x16xbf16> to vector<2x16xbf16>
    %cst = arith.constant dense<0.000000e+00> : vector<2x512xf32>
    %13 = tpu.matmul %12, %3, %cst {dimension_numbers = #tpu.dot_dimension_numbers<[1], [0], [0], [1], [0, 0, 1, 1], [], []>} : vector<2x16xbf16>, vector<16x512xbf16>, vector<2x512xf32> -> vector<2x512xf32>
    %14 = arith.truncf %8 : vector<2x128xf32> to vector<2x128xbf16>
    %cst_13 = arith.constant dense<0.000000e+00> : vector<2x512xf32>
    %15 = tpu.matmul %14, %4, %cst_13 {dimension_numbers = #tpu.dot_dimension_numbers<[1], [0], [0], [1], [0, 0, 1, 1], [], []>} : vector<2x128xbf16>, vector<128x512xbf16>, vector<2x512xf32> -> vector<2x512xf32>
    %16 = arith.addf %13, %15 : vector<2x512xf32>
    %17 = arith.addf %16, %7 : vector<2x512xf32>
    %18 = vector.extract_strided_slice %17 {offsets = [0, 0], sizes = [2, 128], strides = [1, 1]} : vector<2x512xf32> to vector<2x128xf32>
    %19 = arith.negf %18 : vector<2x128xf32>
    %20 = math.exp %19 : vector<2x128xf32>
    %cst_14 = arith.constant 1.000000e+00 : f32
    %21 = vector.broadcast %cst_14 : f32 to vector<2x128xf32>
    %22 = arith.addf %21, %20 : vector<2x128xf32>
    %23 = arith.divf %21, %22 : vector<2x128xf32>
    %24 = vector.extract_strided_slice %17 {offsets = [0, 128], sizes = [2, 128], strides = [1, 1]} : vector<2x512xf32> to vector<2x128xf32>
    %25 = arith.negf %24 : vector<2x128xf32>
    %26 = math.exp %25 : vector<2x128xf32>
    %cst_15 = arith.constant 1.000000e+00 : f32
    %27 = vector.broadcast %cst_15 : f32 to vector<2x128xf32>
    %28 = arith.addf %27, %26 : vector<2x128xf32>
    %29 = arith.divf %27, %28 : vector<2x128xf32>
    %30 = vector.extract_strided_slice %17 {offsets = [0, 256], sizes = [2, 128], strides = [1, 1]} : vector<2x512xf32> to vector<2x128xf32>
    %31 = math.tanh %30 : vector<2x128xf32>
    %32 = vector.extract_strided_slice %17 {offsets = [0, 384], sizes = [2, 128], strides = [1, 1]} : vector<2x512xf32> to vector<2x128xf32>
    %33 = arith.negf %32 : vector<2x128xf32>
    %34 = math.exp %33 : vector<2x128xf32>
    %cst_16 = arith.constant 1.000000e+00 : f32
    %35 = vector.broadcast %cst_16 : f32 to vector<2x128xf32>
    %36 = arith.addf %35, %34 : vector<2x128xf32>
    %37 = arith.divf %35, %36 : vector<2x128xf32>
    %38 = arith.mulf %29, %9 : vector<2x128xf32>
    %39 = arith.mulf %23, %31 : vector<2x128xf32>
    %40 = arith.addf %38, %39 : vector<2x128xf32>
    %41 = math.tanh %40 : vector<2x128xf32>
    %42 = arith.mulf %37, %41 : vector<2x128xf32>
    %c0_17 = arith.constant 0 : index
    %c0_18 = arith.constant 0 : index
    %43 = vector.load %arg11[%c0_17, %c0_18] : memref<2x128xf32, #tpu.memory_space<vmem>>, vector<2x128xf32>
    tpu.vector_store %arg11[%c0_17, %c0_18], %42 {strides = array<i32>} : memref<2x128xf32, #tpu.memory_space<vmem>>, vector<2x128xf32>,
    %c0_19 = arith.constant 0 : index
    %c0_20 = arith.constant 0 : index
    %44 = vector.load %arg12[%c0_19, %c0_20] : memref<2x128xf32, #tpu.memory_space<vmem>>, vector<2x128xf32>
    tpu.vector_store %arg12[%c0_19, %c0_20], %40 {strides = array<i32>} : memref<2x128xf32, #tpu.memory_space<vmem>>, vector<2x128xf32>,
    %45 = arith.truncf %42 : vector<2x128xf32> to vector<2x128xbf16>
    %46 = arith.index_cast %c0_i32_6 : i32 to index
    %c0_21 = arith.constant 0 : index
    %c0_22 = arith.constant 0 : index
    %47 = vector.load %arg8[%46, %c0_21, %c0_22] : memref<8x2x128xbf16, #tpu.memory_space<vmem>>, vector<1x2x128xbf16>
    %48 = vector.shape_cast %47 : vector<1x2x128xbf16> to vector<2x128xbf16>
    %49 = vector.shape_cast %45 : vector<2x128xbf16> to vector<1x2x128xbf16>
    tpu.vector_store %arg8[%46, %c0_21, %c0_22], %49 {strides = array<i32>} : memref<8x2x128xbf16, #tpu.memory_space<vmem>>, vector<1x2x128xbf16>,
    %c1_i32 = arith.constant 1 : i32
    %c0_23 = arith.constant 0 : index
    %c0_24 = arith.constant 0 : index
    %50 = vector.load %arg11[%c0_23, %c0_24] : memref<2x128xf32, #tpu.memory_space<vmem>>, vector<2x128xf32>
    %c0_25 = arith.constant 0 : index
    %c0_26 = arith.constant 0 : index
    %51 = vector.load %arg12[%c0_25, %c0_26] : memref<2x128xf32, #tpu.memory_space<vmem>>, vector<2x128xf32>
    %52 = arith.index_cast %c1_i32 : i32 to index
    %c0_27 = arith.constant 0 : index
    %c0_28 = arith.constant 0 : index
    %53 = vector.load %arg2[%52, %c0_27, %c0_28] : memref<8x2x16xbf16, #tpu.memory_space<vmem>>, vector<1x2x16xbf16>
    %54 = vector.shape_cast %53 : vector<1x2x16xbf16> to vector<2x16xbf16>
    %cst_29 = arith.constant dense<0.000000e+00> : vector<2x512xf32>
    %55 = tpu.matmul %54, %3, %cst_29 {dimension_numbers = #tpu.dot_dimension_numbers<[1], [0], [0], [1], [0, 0, 1, 1], [], []>} : vector<2x16xbf16>, vector<16x512xbf16>, vector<2x512xf32> -> vector<2x512xf32>
    %56 = arith.truncf %50 : vector<2x128xf32> to vector<2x128xbf16>
    %cst_30 = arith.constant dense<0.000000e+00> : vector<2x512xf32>
    %57 = tpu.matmul %56, %4, %cst_30 {dimension_numbers = #tpu.dot_dimension_numbers<[1], [0], [0], [1], [0, 0, 1, 1], [], []>} : vector<2x128xbf16>, vector<128x512xbf16>, vector<2x512xf32> -> vector<2x512xf32>
    %58 = arith.addf %55, %57 : vector<2x512xf32>
    %59 = arith.addf %58, %7 : vector<2x512xf32>
    %60 = vector.extract_strided_slice %59 {offsets = [0, 0], sizes = [2, 128], strides = [1, 1]} : vector<2x512xf32> to vector<2x128xf32>
    %61 = arith.negf %60 : vector<2x128xf32>
    %62 = math.exp %61 : vector<2x128xf32>
    %cst_31 = arith.constant 1.000000e+00 : f32
    %63 = vector.broadcast %cst_31 : f32 to vector<2x128xf32>
    %64 = arith.addf %63, %62 : vector<2x128xf32>
    %65 = arith.divf %63, %64 : vector<2x128xf32>
    %66 = vector.extract_strided_slice %59 {offsets = [0, 128], sizes = [2, 128], strides = [1, 1]} : vector<2x512xf32> to vector<2x128xf32>
    %67 = arith.negf %66 : vector<2x128xf32>
    %68 = math.exp %67 : vector<2x128xf32>
    %cst_32 = arith.constant 1.000000e+00 : f32
    %69 = vector.broadcast %cst_32 : f32 to vector<2x128xf32>
    %70 = arith.addf %69, %68 : vector<2x128xf32>
    %71 = arith.divf %69, %70 : vector<2x128xf32>
    %72 = vector.extract_strided_slice %59 {offsets = [0, 256], sizes = [2, 128], strides = [1, 1]} : vector<2x512xf32> to vector<2x128xf32>
    %73 = math.tanh %72 : vector<2x128xf32>
    %74 = vector.extract_strided_slice %59 {offsets = [0, 384], sizes = [2, 128], strides = [1, 1]} : vector<2x512xf32> to vector<2x128xf32>
    %75 = arith.negf %74 : vector<2x128xf32>
    %76 = math.exp %75 : vector<2x128xf32>
    %cst_33 = arith.constant 1.000000e+00 : f32
    %77 = vector.broadcast %cst_33 : f32 to vector<2x128xf32>
    %78 = arith.addf %77, %76 : vector<2x128xf32>
    %79 = arith.divf %77, %78 : vector<2x128xf32>
    %80 = arith.mulf %71, %51 : vector<2x128xf32>
    %81 = arith.mulf %65, %73 : vector<2x128xf32>
    %82 = arith.addf %80, %81 : vector<2x128xf32>
    %83 = math.tanh %82 : vector<2x128xf32>
    %84 = arith.mulf %79, %83 : vector<2x128xf32>
    %c0_34 = arith.constant 0 : index
    %c0_35 = arith.constant 0 : index
    %85 = vector.load %arg11[%c0_34, %c0_35] : memref<2x128xf32, #tpu.memory_space<vmem>>, vector<2x128xf32>
    tpu.vector_store %arg11[%c0_34, %c0_35], %84 {strides = array<i32>} : memref<2x128xf32, #tpu.memory_space<vmem>>, vector<2x128xf32>,
    %c0_36 = arith.constant 0 : index
    %c0_37 = arith.constant 0 : index
    %86 = vector.load %arg12[%c0_36, %c0_37] : memref<2x128xf32, #tpu.memory_space<vmem>>, vector<2x128xf32>
    tpu.vector_store %arg12[%c0_36, %c0_37], %82 {strides = array<i32>} : memref<2x128xf32, #tpu.memory_space<vmem>>, vector<2x128xf32>,
    %87 = arith.truncf %84 : vector<2x128xf32> to vector<2x128xbf16>
    %88 = arith.index_cast %c1_i32 : i32 to index
    %c0_38 = arith.constant 0 : index
    %c0_39 = arith.constant 0 : index
    %89 = vector.load %arg8[%88, %c0_38, %c0_39] : memref<8x2x128xbf16, #tpu.memory_space<vmem>>, vector<1x2x128xbf16>
    %90 = vector.shape_cast %89 : vector<1x2x128xbf16> to vector<2x128xbf16>
    %91 = vector.shape_cast %87 : vector<2x128xbf16> to vector<1x2x128xbf16>
    tpu.vector_store %arg8[%88, %c0_38, %c0_39], %91 {strides = array<i32>} : memref<8x2x128xbf16, #tpu.memory_space<vmem>>, vector<1x2x128xbf16>,
    %c2_i32 = arith.constant 2 : i32
    %c0_40 = arith.constant 0 : index
    %c0_41 = arith.constant 0 : index
    %92 = vector.load %arg11[%c0_40, %c0_41] : memref<2x128xf32, #tpu.memory_space<vmem>>, vector<2x128xf32>
    %c0_42 = arith.constant 0 : index
    %c0_43 = arith.constant 0 : index
    %93 = vector.load %arg12[%c0_42, %c0_43] : memref<2x128xf32, #tpu.memory_space<vmem>>, vector<2x128xf32>
    %94 = arith.index_cast %c2_i32 : i32 to index
    %c0_44 = arith.constant 0 : index
    %c0_45 = arith.constant 0 : index
    %95 = vector.load %arg2[%94, %c0_44, %c0_45] : memref<8x2x16xbf16, #tpu.memory_space<vmem>>, vector<1x2x16xbf16>
    %96 = vector.shape_cast %95 : vector<1x2x16xbf16> to vector<2x16xbf16>
    %cst_46 = arith.constant dense<0.000000e+00> : vector<2x512xf32>
    %97 = tpu.matmul %96, %3, %cst_46 {dimension_numbers = #tpu.dot_dimension_numbers<[1], [0], [0], [1], [0, 0, 1, 1], [], []>} : vector<2x16xbf16>, vector<16x512xbf16>, vector<2x512xf32> -> vector<2x512xf32>
    %98 = arith.truncf %92 : vector<2x128xf32> to vector<2x128xbf16>
    %cst_47 = arith.constant dense<0.000000e+00> : vector<2x512xf32>
    %99 = tpu.matmul %98, %4, %cst_47 {dimension_numbers = #tpu.dot_dimension_numbers<[1], [0], [0], [1], [0, 0, 1, 1], [], []>} : vector<2x128xbf16>, vector<128x512xbf16>, vector<2x512xf32> -> vector<2x512xf32>
    %100 = arith.addf %97, %99 : vector<2x512xf32>
    %101 = arith.addf %100, %7 : vector<2x512xf32>
    %102 = vector.extract_strided_slice %101 {offsets = [0, 0], sizes = [2, 128], strides = [1, 1]} : vector<2x512xf32> to vector<2x128xf32>
    %103 = arith.negf %102 : vector<2x128xf32>
    %104 = math.exp %103 : vector<2x128xf32>
    %cst_48 = arith.constant 1.000000e+00 : f32
    %105 = vector.broadcast %cst_48 : f32 to vector<2x128xf32>
    %106 = arith.addf %105, %104 : vector<2x128xf32>
    %107 = arith.divf %105, %106 : vector<2x128xf32>
    %108 = vector.extract_strided_slice %101 {offsets = [0, 128], sizes = [2, 128], strides = [1, 1]} : vector<2x512xf32> to vector<2x128xf32>
    %109 = arith.negf %108 : vector<2x128xf32>
    %110 = math.exp %109 : vector<2x128xf32>
    %cst_49 = arith.constant 1.000000e+00 : f32
    %111 = vector.broadcast %cst_49 : f32 to vector<2x128xf32>
    %112 = arith.addf %111, %110 : vector<2x128xf32>
    %113 = arith.divf %111, %112 : vector<2x128xf32>
    %114 = vector.extract_strided_slice %101 {offsets = [0, 256], sizes = [2, 128], strides = [1, 1]} : vector<2x512xf32> to vector<2x128xf32>
    %115 = math.tanh %114 : vector<2x128xf32>
    %116 = vector.extract_strided_slice %101 {offsets = [0, 384], sizes = [2, 128], strides = [1, 1]} : vector<2x512xf32> to vector<2x128xf32>
    %117 = arith.negf %116 : vector<2x128xf32>
    %118 = math.exp %117 : vector<2x128xf32>
    %cst_50 = arith.constant 1.000000e+00 : f32
    %119 = vector.broadcast %cst_50 : f32 to vector<2x128xf32>
    %120 = arith.addf %119, %118 : vector<2x128xf32>
    %121 = arith.divf %119, %120 : vector<2x128xf32>
    %122 = arith.mulf %113, %93 : vector<2x128xf32>
    %123 = arith.mulf %107, %115 : vector<2x128xf32>
    %124 = arith.addf %122, %123 : vector<2x128xf32>
    %125 = math.tanh %124 : vector<2x128xf32>
    %126 = arith.mulf %121, %125 : vector<2x128xf32>
    %c0_51 = arith.constant 0 : index
    %c0_52 = arith.constant 0 : index
    %127 = vector.load %arg11[%c0_51, %c0_52] : memref<2x128xf32, #tpu.memory_space<vmem>>, vector<2x128xf32>
    tpu.vector_store %arg11[%c0_51, %c0_52], %126 {strides = array<i32>} : memref<2x128xf32, #tpu.memory_space<vmem>>, vector<2x128xf32>,
    %c0_53 = arith.constant 0 : index
    %c0_54 = arith.constant 0 : index
    %128 = vector.load %arg12[%c0_53, %c0_54] : memref<2x128xf32, #tpu.memory_space<vmem>>, vector<2x128xf32>
    tpu.vector_store %arg12[%c0_53, %c0_54], %124 {strides = array<i32>} : memref<2x128xf32, #tpu.memory_space<vmem>>, vector<2x128xf32>,
    %129 = arith.truncf %126 : vector<2x128xf32> to vector<2x128xbf16>
    %130 = arith.index_cast %c2_i32 : i32 to index
    %c0_55 = arith.constant 0 : index
    %c0_56 = arith.constant 0 : index
    %131 = vector.load %arg8[%130, %c0_55, %c0_56] : memref<8x2x128xbf16, #tpu.memory_space<vmem>>, vector<1x2x128xbf16>
    %132 = vector.shape_cast %131 : vector<1x2x128xbf16> to vector<2x128xbf16>
    %133 = vector.shape_cast %129 : vector<2x128xbf16> to vector<1x2x128xbf16>
    tpu.vector_store %arg8[%130, %c0_55, %c0_56], %133 {strides = array<i32>} : memref<8x2x128xbf16, #tpu.memory_space<vmem>>, vector<1x2x128xbf16>,
    %c3_i32 = arith.constant 3 : i32
    %c0_57 = arith.constant 0 : index
    %c0_58 = arith.constant 0 : index
    %134 = vector.load %arg11[%c0_57, %c0_58] : memref<2x128xf32, #tpu.memory_space<vmem>>, vector<2x128xf32>
    %c0_59 = arith.constant 0 : index
    %c0_60 = arith.constant 0 : index
    %135 = vector.load %arg12[%c0_59, %c0_60] : memref<2x128xf32, #tpu.memory_space<vmem>>, vector<2x128xf32>
    %136 = arith.index_cast %c3_i32 : i32 to index
    %c0_61 = arith.constant 0 : index
    %c0_62 = arith.constant 0 : index
    %137 = vector.load %arg2[%136, %c0_61, %c0_62] : memref<8x2x16xbf16, #tpu.memory_space<vmem>>, vector<1x2x16xbf16>
    %138 = vector.shape_cast %137 : vector<1x2x16xbf16> to vector<2x16xbf16>
    %cst_63 = arith.constant dense<0.000000e+00> : vector<2x512xf32>
    %139 = tpu.matmul %138, %3, %cst_63 {dimension_numbers = #tpu.dot_dimension_numbers<[1], [0], [0], [1], [0, 0, 1, 1], [], []>} : vector<2x16xbf16>, vector<16x512xbf16>, vector<2x512xf32> -> vector<2x512xf32>
    %140 = arith.truncf %134 : vector<2x128xf32> to vector<2x128xbf16>
    %cst_64 = arith.constant dense<0.000000e+00> : vector<2x512xf32>
    %141 = tpu.matmul %140, %4, %cst_64 {dimension_numbers = #tpu.dot_dimension_numbers<[1], [0], [0], [1], [0, 0, 1, 1], [], []>} : vector<2x128xbf16>, vector<128x512xbf16>, vector<2x512xf32> -> vector<2x512xf32>
    %142 = arith.addf %139, %141 : vector<2x512xf32>
    %143 = arith.addf %142, %7 : vector<2x512xf32>
    %144 = vector.extract_strided_slice %143 {offsets = [0, 0], sizes = [2, 128], strides = [1, 1]} : vector<2x512xf32> to vector<2x128xf32>
    %145 = arith.negf %144 : vector<2x128xf32>
    %146 = math.exp %145 : vector<2x128xf32>
    %cst_65 = arith.constant 1.000000e+00 : f32
    %147 = vector.broadcast %cst_65 : f32 to vector<2x128xf32>
    %148 = arith.addf %147, %146 : vector<2x128xf32>
    %149 = arith.divf %147, %148 : vector<2x128xf32>
    %150 = vector.extract_strided_slice %143 {offsets = [0, 128], sizes = [2, 128], strides = [1, 1]} : vector<2x512xf32> to vector<2x128xf32>
    %151 = arith.negf %150 : vector<2x128xf32>
    %152 = math.exp %151 : vector<2x128xf32>
    %cst_66 = arith.constant 1.000000e+00 : f32
    %153 = vector.broadcast %cst_66 : f32 to vector<2x128xf32>
    %154 = arith.addf %153, %152 : vector<2x128xf32>
    %155 = arith.divf %153, %154 : vector<2x128xf32>
    %156 = vector.extract_strided_slice %143 {offsets = [0, 256], sizes = [2, 128], strides = [1, 1]} : vector<2x512xf32> to vector<2x128xf32>
    %157 = math.tanh %156 : vector<2x128xf32>
    %158 = vector.extract_strided_slice %143 {offsets = [0, 384], sizes = [2, 128], strides = [1, 1]} : vector<2x512xf32> to vector<2x128xf32>
    %159 = arith.negf %158 : vector<2x128xf32>
    %160 = math.exp %159 : vector<2x128xf32>
    %cst_67 = arith.constant 1.000000e+00 : f32
    %161 = vector.broadcast %cst_67 : f32 to vector<2x128xf32>
    %162 = arith.addf %161, %160 : vector<2x128xf32>
    %163 = arith.divf %161, %162 : vector<2x128xf32>
    %164 = arith.mulf %155, %135 : vector<2x128xf32>
    %165 = arith.mulf %149, %157 : vector<2x128xf32>
    %166 = arith.addf %164, %165 : vector<2x128xf32>
    %167 = math.tanh %166 : vector<2x128xf32>
    %168 = arith.mulf %163, %167 : vector<2x128xf32>
    %c0_68 = arith.constant 0 : index
    %c0_69 = arith.constant 0 : index
    %169 = vector.load %arg11[%c0_68, %c0_69] : memref<2x128xf32, #tpu.memory_space<vmem>>, vector<2x128xf32>
    tpu.vector_store %arg11[%c0_68, %c0_69], %168 {strides = array<i32>} : memref<2x128xf32, #tpu.memory_space<vmem>>, vector<2x128xf32>,
    %c0_70 = arith.constant 0 : index
    %c0_71 = arith.constant 0 : index
    %170 = vector.load %arg12[%c0_70, %c0_71] : memref<2x128xf32, #tpu.memory_space<vmem>>, vector<2x128xf32>
    tpu.vector_store %arg12[%c0_70, %c0_71], %166 {strides = array<i32>} : memref<2x128xf32, #tpu.memory_space<vmem>>, vector<2x128xf32>,
    %171 = arith.truncf %168 : vector<2x128xf32> to vector<2x128xbf16>
    %172 = arith.index_cast %c3_i32 : i32 to index
    %c0_72 = arith.constant 0 : index
    %c0_73 = arith.constant 0 : index
    %173 = vector.load %arg8[%172, %c0_72, %c0_73] : memref<8x2x128xbf16, #tpu.memory_space<vmem>>, vector<1x2x128xbf16>
    %174 = vector.shape_cast %173 : vector<1x2x128xbf16> to vector<2x128xbf16>
    %175 = vector.shape_cast %171 : vector<2x128xbf16> to vector<1x2x128xbf16>
    tpu.vector_store %arg8[%172, %c0_72, %c0_73], %175 {strides = array<i32>} : memref<8x2x128xbf16, #tpu.memory_space<vmem>>, vector<1x2x128xbf16>,
    %c4_i32 = arith.constant 4 : i32
    %c0_74 = arith.constant 0 : index
    %c0_75 = arith.constant 0 : index
    %176 = vector.load %arg11[%c0_74, %c0_75] : memref<2x128xf32, #tpu.memory_space<vmem>>, vector<2x128xf32>
    %c0_76 = arith.constant 0 : index
    %c0_77 = arith.constant 0 : index
    %177 = vector.load %arg12[%c0_76, %c0_77] : memref<2x128xf32, #tpu.memory_space<vmem>>, vector<2x128xf32>
    %178 = arith.index_cast %c4_i32 : i32 to index
    %c0_78 = arith.constant 0 : index
    %c0_79 = arith.constant 0 : index
    %179 = vector.load %arg2[%178, %c0_78, %c0_79] : memref<8x2x16xbf16, #tpu.memory_space<vmem>>, vector<1x2x16xbf16>
    %180 = vector.shape_cast %179 : vector<1x2x16xbf16> to vector<2x16xbf16>
    %cst_80 = arith.constant dense<0.000000e+00> : vector<2x512xf32>
    %181 = tpu.matmul %180, %3, %cst_80 {dimension_numbers = #tpu.dot_dimension_numbers<[1], [0], [0], [1], [0, 0, 1, 1], [], []>} : vector<2x16xbf16>, vector<16x512xbf16>, vector<2x512xf32> -> vector<2x512xf32>
    %182 = arith.truncf %176 : vector<2x128xf32> to vector<2x128xbf16>
    %cst_81 = arith.constant dense<0.000000e+00> : vector<2x512xf32>
    %183 = tpu.matmul %182, %4, %cst_81 {dimension_numbers = #tpu.dot_dimension_numbers<[1], [0], [0], [1], [0, 0, 1, 1], [], []>} : vector<2x128xbf16>, vector<128x512xbf16>, vector<2x512xf32> -> vector<2x512xf32>
    %184 = arith.addf %181, %183 : vector<2x512xf32>
    %185 = arith.addf %184, %7 : vector<2x512xf32>
    %186 = vector.extract_strided_slice %185 {offsets = [0, 0], sizes = [2, 128], strides = [1, 1]} : vector<2x512xf32> to vector<2x128xf32>
    %187 = arith.negf %186 : vector<2x128xf32>
    %188 = math.exp %187 : vector<2x128xf32>
    %cst_82 = arith.constant 1.000000e+00 : f32
    %189 = vector.broadcast %cst_82 : f32 to vector<2x128xf32>
    %190 = arith.addf %189, %188 : vector<2x128xf32>
    %191 = arith.divf %189, %190 : vector<2x128xf32>
    %192 = vector.extract_strided_slice %185 {offsets = [0, 128], sizes = [2, 128], strides = [1, 1]} : vector<2x512xf32> to vector<2x128xf32>
    %193 = arith.negf %192 : vector<2x128xf32>
    %194 = math.exp %193 : vector<2x128xf32>
    %cst_83 = arith.constant 1.000000e+00 : f32
    %195 = vector.broadcast %cst_83 : f32 to vector<2x128xf32>
    %196 = arith.addf %195, %194 : vector<2x128xf32>
    %197 = arith.divf %195, %196 : vector<2x128xf32>
    %198 = vector.extract_strided_slice %185 {offsets = [0, 256], sizes = [2, 128], strides = [1, 1]} : vector<2x512xf32> to vector<2x128xf32>
    %199 = math.tanh %198 : vector<2x128xf32>
    %200 = vector.extract_strided_slice %185 {offsets = [0, 384], sizes = [2, 128], strides = [1, 1]} : vector<2x512xf32> to vector<2x128xf32>
    %201 = arith.negf %200 : vector<2x128xf32>
    %202 = math.exp %201 : vector<2x128xf32>
    %cst_84 = arith.constant 1.000000e+00 : f32
    %203 = vector.broadcast %cst_84 : f32 to vector<2x128xf32>
    %204 = arith.addf %203, %202 : vector<2x128xf32>
    %205 = arith.divf %203, %204 : vector<2x128xf32>
    %206 = arith.mulf %197, %177 : vector<2x128xf32>
    %207 = arith.mulf %191, %199 : vector<2x128xf32>
    %208 = arith.addf %206, %207 : vector<2x128xf32>
    %209 = math.tanh %208 : vector<2x128xf32>
    %210 = arith.mulf %205, %209 : vector<2x128xf32>
    %c0_85 = arith.constant 0 : index
    %c0_86 = arith.constant 0 : index
    %211 = vector.load %arg11[%c0_85, %c0_86] : memref<2x128xf32, #tpu.memory_space<vmem>>, vector<2x128xf32>
    tpu.vector_store %arg11[%c0_85, %c0_86], %210 {strides = array<i32>} : memref<2x128xf32, #tpu.memory_space<vmem>>, vector<2x128xf32>,
    %c0_87 = arith.constant 0 : index
    %c0_88 = arith.constant 0 : index
    %212 = vector.load %arg12[%c0_87, %c0_88] : memref<2x128xf32, #tpu.memory_space<vmem>>, vector<2x128xf32>
    tpu.vector_store %arg12[%c0_87, %c0_88], %208 {strides = array<i32>} : memref<2x128xf32, #tpu.memory_space<vmem>>, vector<2x128xf32>,
    %213 = arith.truncf %210 : vector<2x128xf32> to vector<2x128xbf16>
    %214 = arith.index_cast %c4_i32 : i32 to index
    %c0_89 = arith.constant 0 : index
    %c0_90 = arith.constant 0 : index
    %215 = vector.load %arg8[%214, %c0_89, %c0_90] : memref<8x2x128xbf16, #tpu.memory_space<vmem>>, vector<1x2x128xbf16>
    %216 = vector.shape_cast %215 : vector<1x2x128xbf16> to vector<2x128xbf16>
    %217 = vector.shape_cast %213 : vector<2x128xbf16> to vector<1x2x128xbf16>
    tpu.vector_store %arg8[%214, %c0_89, %c0_90], %217 {strides = array<i32>} : memref<8x2x128xbf16, #tpu.memory_space<vmem>>, vector<1x2x128xbf16>,
    %c5_i32 = arith.constant 5 : i32
    %c0_91 = arith.constant 0 : index
    %c0_92 = arith.constant 0 : index
    %218 = vector.load %arg11[%c0_91, %c0_92] : memref<2x128xf32, #tpu.memory_space<vmem>>, vector<2x128xf32>
    %c0_93 = arith.constant 0 : index
    %c0_94 = arith.constant 0 : index
    %219 = vector.load %arg12[%c0_93, %c0_94] : memref<2x128xf32, #tpu.memory_space<vmem>>, vector<2x128xf32>
    %220 = arith.index_cast %c5_i32 : i32 to index
    %c0_95 = arith.constant 0 : index
    %c0_96 = arith.constant 0 : index
    %221 = vector.load %arg2[%220, %c0_95, %c0_96] : memref<8x2x16xbf16, #tpu.memory_space<vmem>>, vector<1x2x16xbf16>
    %222 = vector.shape_cast %221 : vector<1x2x16xbf16> to vector<2x16xbf16>
    %cst_97 = arith.constant dense<0.000000e+00> : vector<2x512xf32>
    %223 = tpu.matmul %222, %3, %cst_97 {dimension_numbers = #tpu.dot_dimension_numbers<[1], [0], [0], [1], [0, 0, 1, 1], [], []>} : vector<2x16xbf16>, vector<16x512xbf16>, vector<2x512xf32> -> vector<2x512xf32>
    %224 = arith.truncf %218 : vector<2x128xf32> to vector<2x128xbf16>
    %cst_98 = arith.constant dense<0.000000e+00> : vector<2x512xf32>
    %225 = tpu.matmul %224, %4, %cst_98 {dimension_numbers = #tpu.dot_dimension_numbers<[1], [0], [0], [1], [0, 0, 1, 1], [], []>} : vector<2x128xbf16>, vector<128x512xbf16>, vector<2x512xf32> -> vector<2x512xf32>
    %226 = arith.addf %223, %225 : vector<2x512xf32>
    %227 = arith.addf %226, %7 : vector<2x512xf32>
    %228 = vector.extract_strided_slice %227 {offsets = [0, 0], sizes = [2, 128], strides = [1, 1]} : vector<2x512xf32> to vector<2x128xf32>
    %229 = arith.negf %228 : vector<2x128xf32>
    %230 = math.exp %229 : vector<2x128xf32>
    %cst_99 = arith.constant 1.000000e+00 : f32
    %231 = vector.broadcast %cst_99 : f32 to vector<2x128xf32>
    %232 = arith.addf %231, %230 : vector<2x128xf32>
    %233 = arith.divf %231, %232 : vector<2x128xf32>
    %234 = vector.extract_strided_slice %227 {offsets = [0, 128], sizes = [2, 128], strides = [1, 1]} : vector<2x512xf32> to vector<2x128xf32>
    %235 = arith.negf %234 : vector<2x128xf32>
    %236 = math.exp %235 : vector<2x128xf32>
    %cst_100 = arith.constant 1.000000e+00 : f32
    %237 = vector.broadcast %cst_100 : f32 to vector<2x128xf32>
    %238 = arith.addf %237, %236 : vector<2x128xf32>
    %239 = arith.divf %237, %238 : vector<2x128xf32>
    %240 = vector.extract_strided_slice %227 {offsets = [0, 256], sizes = [2, 128], strides = [1, 1]} : vector<2x512xf32> to vector<2x128xf32>
    %241 = math.tanh %240 : vector<2x128xf32>
    %242 = vector.extract_strided_slice %227 {offsets = [0, 384], sizes = [2, 128], strides = [1, 1]} : vector<2x512xf32> to vector<2x128xf32>
    %243 = arith.negf %242 : vector<2x128xf32>
    %244 = math.exp %243 : vector<2x128xf32>
    %cst_101 = arith.constant 1.000000e+00 : f32
    %245 = vector.broadcast %cst_101 : f32 to vector<2x128xf32>
    %246 = arith.addf %245, %244 : vector<2x128xf32>
    %247 = arith.divf %245, %246 : vector<2x128xf32>
    %248 = arith.mulf %239, %219 : vector<2x128xf32>
    %249 = arith.mulf %233, %241 : vector<2x128xf32>
    %250 = arith.addf %248, %249 : vector<2x128xf32>
    %251 = math.tanh %250 : vector<2x128xf32>
    %252 = arith.mulf %247, %251 : vector<2x128xf32>
    %c0_102 = arith.constant 0 : index
    %c0_103 = arith.constant 0 : index
    %253 = vector.load %arg11[%c0_102, %c0_103] : memref<2x128xf32, #tpu.memory_space<vmem>>, vector<2x128xf32>
    tpu.vector_store %arg11[%c0_102, %c0_103], %252 {strides = array<i32>} : memref<2x128xf32, #tpu.memory_space<vmem>>, vector<2x128xf32>,
    %c0_104 = arith.constant 0 : index
    %c0_105 = arith.constant 0 : index
    %254 = vector.load %arg12[%c0_104, %c0_105] : memref<2x128xf32, #tpu.memory_space<vmem>>, vector<2x128xf32>
    tpu.vector_store %arg12[%c0_104, %c0_105], %250 {strides = array<i32>} : memref<2x128xf32, #tpu.memory_space<vmem>>, vector<2x128xf32>,
    %255 = arith.truncf %252 : vector<2x128xf32> to vector<2x128xbf16>
    %256 = arith.index_cast %c5_i32 : i32 to index
    %c0_106 = arith.constant 0 : index
    %c0_107 = arith.constant 0 : index
    %257 = vector.load %arg8[%256, %c0_106, %c0_107] : memref<8x2x128xbf16, #tpu.memory_space<vmem>>, vector<1x2x128xbf16>
    %258 = vector.shape_cast %257 : vector<1x2x128xbf16> to vector<2x128xbf16>
    %259 = vector.shape_cast %255 : vector<2x128xbf16> to vector<1x2x128xbf16>
    tpu.vector_store %arg8[%256, %c0_106, %c0_107], %259 {strides = array<i32>} : memref<8x2x128xbf16, #tpu.memory_space<vmem>>, vector<1x2x128xbf16>,
    %c6_i32 = arith.constant 6 : i32
    %c0_108 = arith.constant 0 : index
    %c0_109 = arith.constant 0 : index
    %260 = vector.load %arg11[%c0_108, %c0_109] : memref<2x128xf32, #tpu.memory_space<vmem>>, vector<2x128xf32>
    %c0_110 = arith.constant 0 : index
    %c0_111 = arith.constant 0 : index
    %261 = vector.load %arg12[%c0_110, %c0_111] : memref<2x128xf32, #tpu.memory_space<vmem>>, vector<2x128xf32>
    %262 = arith.index_cast %c6_i32 : i32 to index
    %c0_112 = arith.constant 0 : index
    %c0_113 = arith.constant 0 : index
    %263 = vector.load %arg2[%262, %c0_112, %c0_113] : memref<8x2x16xbf16, #tpu.memory_space<vmem>>, vector<1x2x16xbf16>
    %264 = vector.shape_cast %263 : vector<1x2x16xbf16> to vector<2x16xbf16>
    %cst_114 = arith.constant dense<0.000000e+00> : vector<2x512xf32>
    %265 = tpu.matmul %264, %3, %cst_114 {dimension_numbers = #tpu.dot_dimension_numbers<[1], [0], [0], [1], [0, 0, 1, 1], [], []>} : vector<2x16xbf16>, vector<16x512xbf16>, vector<2x512xf32> -> vector<2x512xf32>
    %266 = arith.truncf %260 : vector<2x128xf32> to vector<2x128xbf16>
    %cst_115 = arith.constant dense<0.000000e+00> : vector<2x512xf32>
    %267 = tpu.matmul %266, %4, %cst_115 {dimension_numbers = #tpu.dot_dimension_numbers<[1], [0], [0], [1], [0, 0, 1, 1], [], []>} : vector<2x128xbf16>, vector<128x512xbf16>, vector<2x512xf32> -> vector<2x512xf32>
    %268 = arith.addf %265, %267 : vector<2x512xf32>
    %269 = arith.addf %268, %7 : vector<2x512xf32>
    %270 = vector.extract_strided_slice %269 {offsets = [0, 0], sizes = [2, 128], strides = [1, 1]} : vector<2x512xf32> to vector<2x128xf32>
    %271 = arith.negf %270 : vector<2x128xf32>
    %272 = math.exp %271 : vector<2x128xf32>
    %cst_116 = arith.constant 1.000000e+00 : f32
    %273 = vector.broadcast %cst_116 : f32 to vector<2x128xf32>
    %274 = arith.addf %273, %272 : vector<2x128xf32>
    %275 = arith.divf %273, %274 : vector<2x128xf32>
    %276 = vector.extract_strided_slice %269 {offsets = [0, 128], sizes = [2, 128], strides = [1, 1]} : vector<2x512xf32> to vector<2x128xf32>
    %277 = arith.negf %276 : vector<2x128xf32>
    %278 = math.exp %277 : vector<2x128xf32>
    %cst_117 = arith.constant 1.000000e+00 : f32
    %279 = vector.broadcast %cst_117 : f32 to vector<2x128xf32>
    %280 = arith.addf %279, %278 : vector<2x128xf32>
    %281 = arith.divf %279, %280 : vector<2x128xf32>
    %282 = vector.extract_strided_slice %269 {offsets = [0, 256], sizes = [2, 128], strides = [1, 1]} : vector<2x512xf32> to vector<2x128xf32>
    %283 = math.tanh %282 : vector<2x128xf32>
    %284 = vector.extract_strided_slice %269 {offsets = [0, 384], sizes = [2, 128], strides = [1, 1]} : vector<2x512xf32> to vector<2x128xf32>
    %285 = arith.negf %284 : vector<2x128xf32>
    %286 = math.exp %285 : vector<2x128xf32>
    %cst_118 = arith.constant 1.000000e+00 : f32
    %287 = vector.broadcast %cst_118 : f32 to vector<2x128xf32>
    %288 = arith.addf %287, %286 : vector<2x128xf32>
    %289 = arith.divf %287, %288 : vector<2x128xf32>
    %290 = arith.mulf %281, %261 : vector<2x128xf32>
    %291 = arith.mulf %275, %283 : vector<2x128xf32>
    %292 = arith.addf %290, %291 : vector<2x128xf32>
    %293 = math.tanh %292 : vector<2x128xf32>
    %294 = arith.mulf %289, %293 : vector<2x128xf32>
    %c0_119 = arith.constant 0 : index
    %c0_120 = arith.constant 0 : index
    %295 = vector.load %arg11[%c0_119, %c0_120] : memref<2x128xf32, #tpu.memory_space<vmem>>, vector<2x128xf32>
    tpu.vector_store %arg11[%c0_119, %c0_120], %294 {strides = array<i32>} : memref<2x128xf32, #tpu.memory_space<vmem>>, vector<2x128xf32>,
    %c0_121 = arith.constant 0 : index
    %c0_122 = arith.constant 0 : index
    %296 = vector.load %arg12[%c0_121, %c0_122] : memref<2x128xf32, #tpu.memory_space<vmem>>, vector<2x128xf32>
    tpu.vector_store %arg12[%c0_121, %c0_122], %292 {strides = array<i32>} : memref<2x128xf32, #tpu.memory_space<vmem>>, vector<2x128xf32>,
    %297 = arith.truncf %294 : vector<2x128xf32> to vector<2x128xbf16>
    %298 = arith.index_cast %c6_i32 : i32 to index
    %c0_123 = arith.constant 0 : index
    %c0_124 = arith.constant 0 : index
    %299 = vector.load %arg8[%298, %c0_123, %c0_124] : memref<8x2x128xbf16, #tpu.memory_space<vmem>>, vector<1x2x128xbf16>
    %300 = vector.shape_cast %299 : vector<1x2x128xbf16> to vector<2x128xbf16>
    %301 = vector.shape_cast %297 : vector<2x128xbf16> to vector<1x2x128xbf16>
    tpu.vector_store %arg8[%298, %c0_123, %c0_124], %301 {strides = array<i32>} : memref<8x2x128xbf16, #tpu.memory_space<vmem>>, vector<1x2x128xbf16>,
    %c7_i32 = arith.constant 7 : i32
    %c0_125 = arith.constant 0 : index
    %c0_126 = arith.constant 0 : index
    %302 = vector.load %arg11[%c0_125, %c0_126] : memref<2x128xf32, #tpu.memory_space<vmem>>, vector<2x128xf32>
    %c0_127 = arith.constant 0 : index
    %c0_128 = arith.constant 0 : index
    %303 = vector.load %arg12[%c0_127, %c0_128] : memref<2x128xf32, #tpu.memory_space<vmem>>, vector<2x128xf32>
    %304 = arith.index_cast %c7_i32 : i32 to index
    %c0_129 = arith.constant 0 : index
    %c0_130 = arith.constant 0 : index
    %305 = vector.load %arg2[%304, %c0_129, %c0_130] : memref<8x2x16xbf16, #tpu.memory_space<vmem>>, vector<1x2x16xbf16>
    %306 = vector.shape_cast %305 : vector<1x2x16xbf16> to vector<2x16xbf16>
    %cst_131 = arith.constant dense<0.000000e+00> : vector<2x512xf32>
    %307 = tpu.matmul %306, %3, %cst_131 {dimension_numbers = #tpu.dot_dimension_numbers<[1], [0], [0], [1], [0, 0, 1, 1], [], []>} : vector<2x16xbf16>, vector<16x512xbf16>, vector<2x512xf32> -> vector<2x512xf32>
    %308 = arith.truncf %302 : vector<2x128xf32> to vector<2x128xbf16>
    %cst_132 = arith.constant dense<0.000000e+00> : vector<2x512xf32>
    %309 = tpu.matmul %308, %4, %cst_132 {dimension_numbers = #tpu.dot_dimension_numbers<[1], [0], [0], [1], [0, 0, 1, 1], [], []>} : vector<2x128xbf16>, vector<128x512xbf16>, vector<2x512xf32> -> vector<2x512xf32>
    %310 = arith.addf %307, %309 : vector<2x512xf32>
    %311 = arith.addf %310, %7 : vector<2x512xf32>
    %312 = vector.extract_strided_slice %311 {offsets = [0, 0], sizes = [2, 128], strides = [1, 1]} : vector<2x512xf32> to vector<2x128xf32>
    %313 = arith.negf %312 : vector<2x128xf32>
    %314 = math.exp %313 : vector<2x128xf32>
    %cst_133 = arith.constant 1.000000e+00 : f32
    %315 = vector.broadcast %cst_133 : f32 to vector<2x128xf32>
    %316 = arith.addf %315, %314 : vector<2x128xf32>
    %317 = arith.divf %315, %316 : vector<2x128xf32>
    %318 = vector.extract_strided_slice %311 {offsets = [0, 128], sizes = [2, 128], strides = [1, 1]} : vector<2x512xf32> to vector<2x128xf32>
    %319 = arith.negf %318 : vector<2x128xf32>
    %320 = math.exp %319 : vector<2x128xf32>
    %cst_134 = arith.constant 1.000000e+00 : f32
    %321 = vector.broadcast %cst_134 : f32 to vector<2x128xf32>
    %322 = arith.addf %321, %320 : vector<2x128xf32>
    %323 = arith.divf %321, %322 : vector<2x128xf32>
    %324 = vector.extract_strided_slice %311 {offsets = [0, 256], sizes = [2, 128], strides = [1, 1]} : vector<2x512xf32> to vector<2x128xf32>
    %325 = math.tanh %324 : vector<2x128xf32>
    %326 = vector.extract_strided_slice %311 {offsets = [0, 384], sizes = [2, 128], strides = [1, 1]} : vector<2x512xf32> to vector<2x128xf32>
    %327 = arith.negf %326 : vector<2x128xf32>
    %328 = math.exp %327 : vector<2x128xf32>
    %cst_135 = arith.constant 1.000000e+00 : f32
    %329 = vector.broadcast %cst_135 : f32 to vector<2x128xf32>
    %330 = arith.addf %329, %328 : vector<2x128xf32>
    %331 = arith.divf %329, %330 : vector<2x128xf32>
    %332 = arith.mulf %323, %303 : vector<2x128xf32>
    %333 = arith.mulf %317, %325 : vector<2x128xf32>
    %334 = arith.addf %332, %333 : vector<2x128xf32>
    %335 = math.tanh %334 : vector<2x128xf32>
    %336 = arith.mulf %331, %335 : vector<2x128xf32>
    %c0_136 = arith.constant 0 : index
    %c0_137 = arith.constant 0 : index
    %337 = vector.load %arg11[%c0_136, %c0_137] : memref<2x128xf32, #tpu.memory_space<vmem>>, vector<2x128xf32>
    tpu.vector_store %arg11[%c0_136, %c0_137], %336 {strides = array<i32>} : memref<2x128xf32, #tpu.memory_space<vmem>>, vector<2x128xf32>,
    %c0_138 = arith.constant 0 : index
    %c0_139 = arith.constant 0 : index
    %338 = vector.load %arg12[%c0_138, %c0_139] : memref<2x128xf32, #tpu.memory_space<vmem>>, vector<2x128xf32>
    tpu.vector_store %arg12[%c0_138, %c0_139], %334 {strides = array<i32>} : memref<2x128xf32, #tpu.memory_space<vmem>>, vector<2x128xf32>,
    %339 = arith.truncf %336 : vector<2x128xf32> to vector<2x128xbf16>
    %340 = arith.index_cast %c7_i32 : i32 to index
    %c0_140 = arith.constant 0 : index
    %c0_141 = arith.constant 0 : index
    %341 = vector.load %arg8[%340, %c0_140, %c0_141] : memref<8x2x128xbf16, #tpu.memory_space<vmem>>, vector<1x2x128xbf16>
    %342 = vector.shape_cast %341 : vector<1x2x128xbf16> to vector<2x128xbf16>
    %343 = vector.shape_cast %339 : vector<2x128xbf16> to vector<1x2x128xbf16>
    tpu.vector_store %arg8[%340, %c0_140, %c0_141], %343 {strides = array<i32>} : memref<8x2x128xbf16, #tpu.memory_space<vmem>>, vector<1x2x128xbf16>,
    %c8_i32 = arith.constant 8 : i32
    %c0_i32_142 = arith.constant 0 : i32
    %344 = arith.cmpi eq, %arg1, %c0_i32_142 : i32
    %345 = arith.extui %344 : i1 to i32
    %c0_i32_143 = arith.constant 0 : i32
    %346 = arith.cmpi ne, %345, %c0_i32_143 : i32
    scf.if %346 {
      %c0_144 = arith.constant 0 : index
      %c0_145 = arith.constant 0 : index
      %347 = vector.load %arg11[%c0_144, %c0_145] : memref<2x128xf32, #tpu.memory_space<vmem>>, vector<2x128xf32>
      %c0_146 = arith.constant 0 : index
      %c0_147 = arith.constant 0 : index
      %348 = vector.load %arg9[%c0_146, %c0_147] : memref<2x128xf32, #tpu.memory_space<vmem>>, vector<2x128xf32>
      tpu.vector_store %arg9[%c0_146, %c0_147], %347 {strides = array<i32>} : memref<2x128xf32, #tpu.memory_space<vmem>>, vector<2x128xf32>,
      %c0_148 = arith.constant 0 : index
      %c0_149 = arith.constant 0 : index
      %349 = vector.load %arg12[%c0_148, %c0_149] : memref<2x128xf32, #tpu.memory_space<vmem>>, vector<2x128xf32>
      %c0_150 = arith.constant 0 : index
      %c0_151 = arith.constant 0 : index
      %350 = vector.load %arg10[%c0_150, %c0_151] : memref<2x128xf32, #tpu.memory_space<vmem>>, vector<2x128xf32>
      tpu.vector_store %arg10[%c0_150, %c0_151], %349 {strides = array<i32>} : memref<2x128xf32, #tpu.memory_space<vmem>>, vector<2x128xf32>,
    } else {
    }
    return
  }
  func.func @transform_0(%arg0: i32, %arg1: i32) -> (i32, i32, i32) {
    %c0_i32 = arith.constant 0 : i32
    %c0_i32_0 = arith.constant 0 : i32
    return %arg1, %arg0, %c0_i32 : i32, i32, i32
  }
  func.func @transform_1(%arg0: i32, %arg1: i32) -> (i32, i32) {
    %c0_i32 = arith.constant 0 : i32
    %c0_i32_0 = arith.constant 0 : i32
    %c0_i32_1 = arith.constant 0 : i32
    return %c0_i32, %c0_i32_0 : i32, i32
  }
  func.func @transform_2(%arg0: i32, %arg1: i32) -> (i32, i32) {
    %c0_i32 = arith.constant 0 : i32
    %c0_i32_0 = arith.constant 0 : i32
    %c0_i32_1 = arith.constant 0 : i32
    return %c0_i32, %c0_i32_0 : i32, i32
  }
  func.func @transform_3(%arg0: i32, %arg1: i32) -> (i32, i32) {
    %c0_i32 = arith.constant 0 : i32
    %c0_i32_0 = arith.constant 0 : i32
    %c0_i32_1 = arith.constant 0 : i32
    return %c0_i32, %c0_i32_0 : i32, i32
  }
  func.func @transform_4(%arg0: i32, %arg1: i32) -> (i32, i32) {
    %c0_i32 = arith.constant 0 : i32
    %c0_i32_0 = arith.constant 0 : i32
    return %arg0, %c0_i32 : i32, i32
  }
  func.func @transform_5(%arg0: i32, %arg1: i32) -> (i32, i32) {
    %c0_i32 = arith.constant 0 : i32
    %c0_i32_0 = arith.constant 0 : i32
    return %arg0, %c0_i32 : i32, i32
  }
  func.func @transform_6(%arg0: i32, %arg1: i32) -> (i32, i32, i32) {
    %c0_i32 = arith.constant 0 : i32
    %c0_i32_0 = arith.constant 0 : i32
    return %arg1, %arg0, %c0_i32 : i32, i32, i32
  }
  func.func @transform_7(%arg0: i32, %arg1: i32) -> (i32, i32) {
    %c0_i32 = arith.constant 0 : i32
    %c0_i32_0 = arith.constant 0 : i32
    return %arg0, %c0_i32 : i32, i32
  }
  func.func @transform_8(%arg0: i32, %arg1: i32) -> (i32, i32) {
    %c0_i32 = arith.constant 0 : i32
    %c0_i32_0 = arith.constant 0 : i32
    return %arg0, %c0_i32 : i32, i32
  }
}

</mosaic_0001>

<llo_original>
// kernel: tpu_custom_call.1
$region0: #{tpu_custom_call.1}
  #allocation0 [shape = 'u32[]', space=smem, size = 0x4, offset = 0x4, fixed_abs, tag = 'smem constant byte address 0x4 - core index']
  #allocation1 [shape = 'u32[144,128]{1,0:T(1,128)}', space=vmem, size = 0x12000, scoped, tag = 'internal scratch']
  #allocation2 [shape = 'f32[2,128]{1,0:T(2,128)}', space=vmem, size = 0x400, scoped, tag = 'scratch operand']
  #allocation3 [shape = 'f32[2,128]{1,0:T(2,128)}', space=vmem, size = 0x400, scoped, tag = 'scratch operand']
  %s0 = inlined_call_operand.hbm [shape: bf16[8,2,16], index: 0, kind: input, shape index: {}]
  %s1 = inlined_call_operand.hbm [shape: bf16[16,512], index: 1, kind: input, shape index: {}]
  %s2 = inlined_call_operand.hbm [shape: bf16[128,512], index: 2, kind: input, shape index: {}]
  %s3 = inlined_call_operand.vmem [shape: f32[1,512], index: 3, kind: input, shape index: {}]
  %s4 = inlined_call_operand.vmem [shape: f32[2,128], index: 4, kind: input, shape index: {}]
  %s5 = inlined_call_operand.vmem [shape: f32[2,128], index: 5, kind: input, shape index: {}]
  %s6 = inlined_call_operand.hbm [shape: bf16[8,2,128], index: 6, kind: output, shape index: {0}]
  %s7 = inlined_call_operand.hbm [shape: f32[2,128], index: 7, kind: output, shape index: {1}]
  %s8 = inlined_call_operand.hbm [shape: f32[2,128], index: 8, kind: output, shape index: {2}]
  %9 = xla_tuple %s6, %s7, %s8
  %s10 = sld [smem:[#allocation0]]
  $region70: #{tpu_custom_call.1} parent=0
    _
  %s12 = ssub.s32 1, %s10
  %s13 = scalar_select 0, %s12, %s10
  $region1: #{tpu_custom_call.1} parent=0
    #allocation4 [shape = 'u8[4096]{0}', space=vmem, size = 0x1000, scoped, tag = 'input window, operand 0, single buffered']
    #allocation5 [shape = 's32[1]{0}', space=sflag, size = 0x4, scoped, tag = 'scoped memory for tpu_custom_call.1']
    #allocation6 [shape = 's32[1]{0}', space=sflag, size = 0x4, scoped, tag = 'scoped memory for tpu_custom_call.1']
    #allocation7 [shape = 'u8[16384]{0}', space=vmem, size = 0x4000, scoped, tag = 'input window, operand 1, single buffered']
    #allocation8 [shape = 's32[1]{0}', space=sflag, size = 0x4, scoped, tag = 'scoped memory for tpu_custom_call.1']
    #allocation9 [shape = 'u8[131072]{0}', space=vmem, size = 0x20000, scoped, tag = 'input window, operand 2, single buffered']
    #allocation10 [shape = 'u8[4096]{0}', space=vmem, size = 0x1000, scoped, tag = 'output window, operand 0, single buffered']
    #allocation11 [shape = 'u8[1024]{0}', space=vmem, size = 0x400, scoped, tag = 'output window, operand 1, single buffered']
    #allocation12 [shape = 's32[1]{0}', space=sflag, size = 0x4, scoped, tag = 'scoped memory for tpu_custom_call.1']
    #allocation13 [shape = 'u8[1024]{0}', space=vmem, size = 0x400, scoped, tag = 'output window, operand 2, single buffered']
    %14 = vsyncpa [#allocation5], 0
    %15 = vsyncpa [#allocation8], 0
    %16 = vsyncpa [#allocation6], 0
    %17 = vsyncpa [#allocation12], 0
    // Predicated region
    $region2: #{tpu_custom_call.1} parent=1 // pred_check
      _
    $region3: #{tpu_custom_call.1} parent=1 // pred_check_branch
      %19 = sbr.rel (0) target = $region5
    $region4: #{tpu_custom_call.1} parent=1 // pred_region
      %s21 = ssub.s32 128, 128
      %22 = vsyncadd [#allocation5], %s21
      %s23 = sshll.u32 [#allocation4], 4
      %s24 = int_to_ptr.vmem [resolvable:$true] %s23
      %29 = dma.hbm_to_vmem [thread:$0]  %s0, 128, %s24, [#allocation5], 16, 16, 1
    $region5: #{tpu_custom_call.1} parent=1 // pred_fallthru
      _
    // Predicated region
    $region6: #{tpu_custom_call.1} parent=1 // pred_check
      _
    $region7: #{tpu_custom_call.1} parent=1 // pred_check_branch
      %31 = sbr.rel (0) target = $region9
    $region8: #{tpu_custom_call.1} parent=1 // pred_region
      %s33 = ssub.s32 512, 512
      %34 = vsyncadd [#allocation8], %s33
      %s35 = sshll.u32 [#allocation7], 4
      %s36 = int_to_ptr.vmem [resolvable:$true] %s35
      %41 = dma.hbm_to_vmem [thread:$0]  %s1, 512, %s36, [#allocation8], 256, 256, 16
    $region9: #{tpu_custom_call.1} parent=1 // pred_fallthru
      _
    // Predicated region
    $region10: #{tpu_custom_call.1} parent=1 // pred_check
      _
    $region11: #{tpu_custom_call.1} parent=1 // pred_check_branch
      %43 = sbr.rel (0) target = $region13
    $region12: #{tpu_custom_call.1} parent=1 // pred_region
      %s45 = ssub.s32 4096, 4096
      %46 = vsyncadd [#allocation8], %s45
      %s47 = sshll.u32 [#allocation9], 4
      %s48 = int_to_ptr.vmem [resolvable:$true] %s47
      %53 = dma.hbm_to_vmem [thread:$0]  %s2, 4096, %s48, [#allocation8], 256, 256, 16
    $region13: #{tpu_custom_call.1} parent=1 // pred_fallthru
      _
    // Predicated region
    $region14: #{tpu_custom_call.1} parent=1 // pred_check
      _
    $region15: #{tpu_custom_call.1} parent=1 // pred_check_branch
      %55 = sbr.rel (0) target = $region17
    $region16: #{tpu_custom_call.1} parent=1 // pred_region
      _
    $region17: #{tpu_custom_call.1} parent=1 // pred_fallthru
      _
    // Predicated region
    $region18: #{tpu_custom_call.1} parent=1 // pred_check
      _
    $region19: #{tpu_custom_call.1} parent=1 // pred_check_branch
      %57 = sbr.rel (0) target = $region21
    $region20: #{tpu_custom_call.1} parent=1 // pred_region
      _
    $region21: #{tpu_custom_call.1} parent=1 // pred_fallthru
      _
    // Predicated region
    $region22: #{tpu_custom_call.1} parent=1 // pred_check
      _
    $region23: #{tpu_custom_call.1} parent=1 // pred_check_branch
      %59 = sbr.rel (0) target = $region25
    $region24: #{tpu_custom_call.1} parent=1 // pred_region
      _
    $region25: #{tpu_custom_call.1} parent=1 // pred_fallthru
      _
    // Predicated region
    $region26: #{tpu_custom_call.1} parent=1 // pred_check
      _
    $region27: #{tpu_custom_call.1} parent=1 // pred_check_branch
      %61 = sbr.rel (0) target = $region29
    $region28: #{tpu_custom_call.1} parent=1 // pred_region
      %62 = dma.done [#allocation5], 128
    $region29: #{tpu_custom_call.1} parent=1 // pred_fallthru
      _
    // Predicated region
    $region30: #{tpu_custom_call.1} parent=1 // pred_check
      _
    $region31: #{tpu_custom_call.1} parent=1 // pred_check_branch
      %64 = sbr.rel (0) target = $region33
    $region32: #{tpu_custom_call.1} parent=1 // pred_region
      %65 = dma.done [#allocation8], 512
    $region33: #{tpu_custom_call.1} parent=1 // pred_fallthru
      _
    // Predicated region
    $region34: #{tpu_custom_call.1} parent=1 // pred_check
      _
    $region35: #{tpu_custom_call.1} parent=1 // pred_check_branch
      %67 = sbr.rel (0) target = $region37
    $region36: #{tpu_custom_call.1} parent=1 // pred_region
      %68 = dma.done [#allocation8], 4096
    $region37: #{tpu_custom_call.1} parent=1 // pred_fallthru
      _
    %p70 = scmp.eq.s32.totalorder 0, 0
    // Predicated region
    $region38: #{tpu_custom_call.1} parent=1 // pred_check
      %p71 = pneg %p70
    $region39: #{tpu_custom_call.1} parent=1 // pred_check_branch
      %73 = sbr.rel (%p71) target = $region41
    $region40: #{tpu_custom_call.1} parent=1 // pred_region
      %v74 = vld [vmem:[%s4] sm:$0x3]
      %75 = vst [vmem:[#allocation2] sm:$0x3] %v74
      %v76 = vld [vmem:[%s5] sm:$0x3]
      %77 = vst [vmem:[#allocation3] sm:$0x3] %v76
    $region41: #{tpu_custom_call.1} parent=1 // pred_fallthru
      _
    %v78 = vld [vmem:[#allocation7] sm:$0xff]
    %v79 = vld [vmem:[#allocation7 + $0x8] sm:$0xff]
    %v80 = vld [vmem:[#allocation7 + $0x10] sm:$0xff]
    %v81 = vld [vmem:[#allocation7 + $0x18] sm:$0xff]
    %v82 = vld [vmem:[#allocation9] sm:$0xff]
    %v83 = vld [vmem:[#allocation9 + $0x8] sm:$0xff]
    %v84 = vld [vmem:[#allocation9 + $0x10] sm:$0xff]
    %v85 = vld [vmem:[#allocation9 + $0x18] sm:$0xff]
    %v86 = vld [vmem:[#allocation9 + $0x20] sm:$0xff]
    %v87 = vld [vmem:[#allocation9 + $0x28] sm:$0xff]
    %v88 = vld [vmem:[#allocation9 + $0x30] sm:$0xff]
    %v89 = vld [vmem:[#allocation9 + $0x38] sm:$0xff]
    %v90 = vld [vmem:[#allocation9 + $0x40] sm:$0xff]
    %v91 = vld [vmem:[#allocation9 + $0x48] sm:$0xff]
    %v92 = vld [vmem:[#allocation9 + $0x50] sm:$0xff]
    %v93 = vld [vmem:[#allocation9 + $0x58] sm:$0xff]
    %v94 = vld [vmem:[#allocation9 + $0x60] sm:$0xff]
    %v95 = vld [vmem:[#allocation9 + $0x68] sm:$0xff]
    %v96 = vld [vmem:[#allocation9 + $0x70] sm:$0xff]
    %v97 = vld [vmem:[#allocation9 + $0x78] sm:$0xff]
    %v98 = vld [vmem:[#allocation9 + $0x80] sm:$0xff]
    %v99 = vld [vmem:[#allocation9 + $0x88] sm:$0xff]
    %v100 = vld [vmem:[#allocation9 + $0x90] sm:$0xff]
    %v101 = vld [vmem:[#allocation9 + $0x98] sm:$0xff]
    %v102 = vld [vmem:[#allocation9 + $0xa0] sm:$0xff]
    %v103 = vld [vmem:[#allocation9 + $0xa8] sm:$0xff]
    %v104 = vld [vmem:[#allocation9 + $0xb0] sm:$0xff]
    %v105 = vld [vmem:[#allocation9 + $0xb8] sm:$0xff]
    %v106 = vld [vmem:[#allocation9 + $0xc0] sm:$0xff]
    %v107 = vld [vmem:[#allocation9 + $0xc8] sm:$0xff]
    %v108 = vld [vmem:[#allocation9 + $0xd0] sm:$0xff]
    %v109 = vld [vmem:[#allocation9 + $0xd8] sm:$0xff]
    %v110 = vld [vmem:[#allocation9 + $0xe0] sm:$0xff]
    %v111 = vld [vmem:[#allocation9 + $0xe8] sm:$0xff]
    %v112 = vld [vmem:[#allocation9 + $0xf0] sm:$0xff]
    %v113 = vld [vmem:[#allocation9 + $0xf8] sm:$0xff]
    %v114 = vld [vmem:[%s3] sm:$0xf]
    %v116 = vlaneseq
    %v117 = vshrl.u32 %v116, 7
    %v118 = vsub.s32 0, %v117
    %v119 = vrot.slane %v114, %v118
    %v120 = vlaneseq
    %v121 = vshrl.u32 %v120, 7
    %v122 = vsub.s32 1, %v121
    %v123 = vrot.slane %v114, %v122
    %v124 = vlaneseq
    %v125 = vshrl.u32 %v124, 7
    %v126 = vsub.s32 2, %v125
    %v127 = vrot.slane %v114, %v126
    %v128 = vlaneseq
    %v129 = vshrl.u32 %v128, 7
    %v130 = vsub.s32 3, %v129
    %v131 = vrot.slane %v114, %v130
    %v136 = vld [vmem:[#allocation2] sm:$0x3]
    %v137 = vld [vmem:[#allocation3] sm:$0x3]
    %v138 = vld [vmem:[#allocation4] sm:$0x1]
    %v139 = vpack.c.bf16 %v136, %v136
    %v172 = vunpack.c.l.b16 %v82
    %v173 = vunpack.c.h.b16 %v82
    %v174 = vunpack.c.l.b16 %v83
    %v175 = vunpack.c.h.b16 %v83
    %v176 = vunpack.c.l.b16 %v84
    %v177 = vunpack.c.h.b16 %v84
    %v178 = vunpack.c.l.b16 %v85
    %v179 = vunpack.c.h.b16 %v85
    %v180 = vunpack.c.l.b16 %v86
    %v181 = vunpack.c.h.b16 %v86
    %v182 = vunpack.c.l.b16 %v87
    %v183 = vunpack.c.h.b16 %v87
    %v184 = vunpack.c.l.b16 %v88
    %v185 = vunpack.c.h.b16 %v88
    %v186 = vunpack.c.l.b16 %v89
    %v187 = vunpack.c.h.b16 %v89
    %v188 = vunpack.c.l.b16 %v90
    %v189 = vunpack.c.h.b16 %v90
    %v190 = vunpack.c.l.b16 %v91
    %v191 = vunpack.c.h.b16 %v91
    %v192 = vunpack.c.l.b16 %v92
    %v193 = vunpack.c.h.b16 %v92
    %v194 = vunpack.c.l.b16 %v93
    %v195 = vunpack.c.h.b16 %v93
    %v196 = vunpack.c.l.b16 %v94
    %v197 = vunpack.c.h.b16 %v94
    %v198 = vunpack.c.l.b16 %v95
    %v199 = vunpack.c.h.b16 %v95
    %v200 = vunpack.c.l.b16 %v96
    %v201 = vunpack.c.h.b16 %v96
    %v202 = vunpack.c.l.b16 %v97
    %v203 = vunpack.c.h.b16 %v97
    %v204 = vunpack.c.l.b16 %v98
    %v205 = vunpack.c.h.b16 %v98
    %v206 = vunpack.c.l.b16 %v99
    %v207 = vunpack.c.h.b16 %v99
    %v208 = vunpack.c.l.b16 %v100
    %v209 = vunpack.c.h.b16 %v100
    %v210 = vunpack.c.l.b16 %v101
    %v211 = vunpack.c.h.b16 %v101
    %v212 = vunpack.c.l.b16 %v102
    %v213 = vunpack.c.h.b16 %v102
    %v214 = vunpack.c.l.b16 %v103
    %v215 = vunpack.c.h.b16 %v103
    %v216 = vunpack.c.l.b16 %v104
    %v217 = vunpack.c.h.b16 %v104
    %v218 = vunpack.c.l.b16 %v105
    %v219 = vunpack.c.h.b16 %v105
    %v220 = vunpack.c.l.b16 %v106
    %v221 = vunpack.c.h.b16 %v106
    %v222 = vunpack.c.l.b16 %v107
    %v223 = vunpack.c.h.b16 %v107
    %v224 = vunpack.c.l.b16 %v108
    %v225 = vunpack.c.h.b16 %v108
    %v226 = vunpack.c.l.b16 %v109
    %v227 = vunpack.c.h.b16 %v109
    %v228 = vunpack.c.l.b16 %v110
    %v229 = vunpack.c.h.b16 %v110
    %v230 = vunpack.c.l.b16 %v111
    %v231 = vunpack.c.h.b16 %v111
    %v232 = vunpack.c.l.b16 %v112
    %v233 = vunpack.c.h.b16 %v112
    %v234 = vunpack.c.l.b16 %v113
    %v235 = vunpack.c.h.b16 %v113
    %v236 = vpack.c.b16 %v176, %v172
    %v237 = vpack.c.b16 %v177, %v173
    %v238 = vpack.c.b16 %v178, %v174
    %v239 = vpack.c.b16 %v179, %v175
    %v240 = vpack.c.b16 %v184, %v180
    %v241 = vpack.c.b16 %v185, %v181
    %v242 = vpack.c.b16 %v186, %v182
    %v243 = vpack.c.b16 %v187, %v183
    %v244 = vpack.c.b16 %v192, %v188
    %v245 = vpack.c.b16 %v193, %v189
    %v246 = vpack.c.b16 %v194, %v190
    %v247 = vpack.c.b16 %v195, %v191
    %v248 = vpack.c.b16 %v200, %v196
    %v249 = vpack.c.b16 %v201, %v197
    %v250 = vpack.c.b16 %v202, %v198
    %v251 = vpack.c.b16 %v203, %v199
    %v252 = vpack.c.b16 %v208, %v204
    %v253 = vpack.c.b16 %v209, %v205
    %v254 = vpack.c.b16 %v210, %v206
    %v255 = vpack.c.b16 %v211, %v207
    %v256 = vpack.c.b16 %v216, %v212
    %v257 = vpack.c.b16 %v217, %v213
    %v258 = vpack.c.b16 %v218, %v214
    %v259 = vpack.c.b16 %v219, %v215
    %v260 = vpack.c.b16 %v224, %v220
    %v261 = vpack.c.b16 %v225, %v221
    %v262 = vpack.c.b16 %v226, %v222
    %v263 = vpack.c.b16 %v227, %v223
    %v264 = vpack.c.b16 %v232, %v228
    %v265 = vpack.c.b16 %v233, %v229
    %v266 = vpack.c.b16 %v234, %v230
    %v267 = vpack.c.b16 %v235, %v231
    %300 = vmatprep.subr.bf16.mxu0 %v237
    %301 = vmatpush1.bf16.msra.mxu0 %v236
    %302 = vmatprep.subr.bf16.mxu0 %v241
    %303 = vmatpush1.bf16.msra.mxu0 %v240
    %304 = vmatprep.subr.bf16.mxu0 %v245
    %305 = vmatpush1.bf16.msra.mxu0 %v244
    %306 = vmatprep.subr.bf16.mxu0 %v249
    %307 = vmatpush1.bf16.msra.mxu0 %v248
    %308 = vmatprep.subr.bf16.mxu0 %v253
    %309 = vmatpush1.bf16.msra.mxu0 %v252
    %310 = vmatprep.subr.bf16.mxu0 %v257
    %311 = vmatpush1.bf16.msra.mxu0 %v256
    %312 = vmatprep.subr.bf16.mxu0 %v261
    %313 = vmatpush1.bf16.msra.mxu0 %v260
    %314 = vmatprep.subr.bf16.mxu0 %v265
    %315 = vmatpush1.bf16.msra.mxu0 %v264
    %316 = vmatprep.subr.bf16.mxu0 0
    %317 = vmatpush1.bf16.msra.mxu0 0
    %318 = vmatprep.subr.bf16.mxu0 0
    %319 = vmatpush1.bf16.msra.mxu0 0
    %320 = vmatprep.subr.bf16.mxu0 0
    %321 = vmatpush1.bf16.msra.mxu0 0
    %322 = vmatprep.subr.bf16.mxu0 0
    %323 = vmatpush1.bf16.msra.mxu0 0
    %324 = vmatprep.subr.bf16.mxu0 0
    %325 = vmatpush1.bf16.msra.mxu0 0
    %326 = vmatprep.subr.bf16.mxu0 0
    %327 = vmatpush1.bf16.msra.mxu0 0
    %328 = vmatprep.subr.bf16.mxu0 0
    %329 = vmatpush1.bf16.msra.mxu0 0
    %330 = vmatprep.subr.bf16.mxu0 0
    %331 = vmatpush1.bf16.msra.mxu0 0
    %332 = vmatprep.mubr.bf16.mxu0 0
    %333 = vmatmul.mubr.bf16.gmra.mrb[0].mxu0 %v139
    %v334 = vpop.f32.mrb[0].mxu0
    %v335 = vadd.f32 0.0, %v334
    %v336 = vpop.f32.mrb[0].mxu0
    %v337 = vadd.f32 0.0, %v336
    %v338 = vpop.f32.mrb[0].mxu0
    %v339 = vpop.f32.mrb[0].mxu0
    %340 = vdwg.mxu0
    %341 = vmatprep.subr.bf16.mxu0 %v239
    %342 = vmatpush1.bf16.msra.mxu0 %v238
    %343 = vmatprep.subr.bf16.mxu0 %v243
    %344 = vmatpush1.bf16.msra.mxu0 %v242
    %345 = vmatprep.subr.bf16.mxu0 %v247
    %346 = vmatpush1.bf16.msra.mxu0 %v246
    %347 = vmatprep.subr.bf16.mxu0 %v251
    %348 = vmatpush1.bf16.msra.mxu0 %v250
    %349 = vmatprep.subr.bf16.mxu0 %v255
    %350 = vmatpush1.bf16.msra.mxu0 %v254
    %351 = vmatprep.subr.bf16.mxu0 %v259
    %352 = vmatpush1.bf16.msra.mxu0 %v258
    %353 = vmatprep.subr.bf16.mxu0 %v263
    %354 = vmatpush1.bf16.msra.mxu0 %v262
    %355 = vmatprep.subr.bf16.mxu0 %v267
    %356 = vmatpush1.bf16.msra.mxu0 %v266
    %357 = vmatprep.subr.bf16.mxu0 0
    %358 = vmatpush1.bf16.msra.mxu0 0
    %359 = vmatprep.subr.bf16.mxu0 0
    %360 = vmatpush1.bf16.msra.mxu0 0
    %361 = vmatprep.subr.bf16.mxu0 0
    %362 = vmatpush1.bf16.msra.mxu0 0
    %363 = vmatprep.subr.bf16.mxu0 0
    %364 = vmatpush1.bf16.msra.mxu0 0
    %365 = vmatprep.subr.bf16.mxu0 0
    %366 = vmatpush1.bf16.msra.mxu0 0
    %367 = vmatprep.subr.bf16.mxu0 0
    %368 = vmatpush1.bf16.msra.mxu0 0
    %369 = vmatprep.subr.bf16.mxu0 0
    %370 = vmatpush1.bf16.msra.mxu0 0
    %371 = vmatprep.subr.bf16.mxu0 0
    %372 = vmatpush1.bf16.msra.mxu0 0
    %373 = vmatprep.mubr.bf16.mxu0 0
    %374 = vmatmul.mubr.bf16.gmra.mrb[0].mxu0 %v139
    %v375 = vpop.f32.mrb[0].mxu0
    %v376 = vadd.f32 0.0, %v375
    %v377 = vpop.f32.mrb[0].mxu0
    %v378 = vadd.f32 0.0, %v377
    %v379 = vpop.f32.mrb[0].mxu0
    %v380 = vpop.f32.mrb[0].mxu0
    %381 = vdwg.mxu0
    %v386 = vunpack.c.l.b16 %v78
    %v387 = vunpack.c.h.b16 %v78
    %v388 = vunpack.c.l.b16 %v79
    %v389 = vunpack.c.h.b16 %v79
    %v390 = vunpack.c.l.b16 %v80
    %v391 = vunpack.c.h.b16 %v80
    %v392 = vunpack.c.l.b16 %v81
    %v393 = vunpack.c.h.b16 %v81
    %v394 = vpack.c.b16 %v390, %v386
    %v395 = vpack.c.b16 %v391, %v387
    %v396 = vpack.c.b16 %v392, %v388
    %v397 = vpack.c.b16 %v393, %v389
    %vm402 = vcmask 130048
    %v404 = vsel %vm402, %v138, 0
    %406 = vmatprep.subr.bf16.mxu0 %v395
    %407 = vmatpush1.bf16.msra.mxu0 %v394
    %408 = vmatprep.subr.bf16.mxu0 0
    %409 = vmatpush1.bf16.msra.mxu0 0
    %410 = vmatprep.subr.bf16.mxu0 0
    %411 = vmatpush1.bf16.msra.mxu0 0
    %412 = vmatprep.subr.bf16.mxu0 0
    %413 = vmatpush1.bf16.msra.mxu0 0
    %414 = vmatprep.subr.bf16.mxu0 0
    %415 = vmatpush1.bf16.msra.mxu0 0
    %416 = vmatprep.subr.bf16.mxu0 0
    %417 = vmatpush1.bf16.msra.mxu0 0
    %418 = vmatprep.subr.bf16.mxu0 0
    %419 = vmatpush1.bf16.msra.mxu0 0
    %420 = vmatprep.subr.bf16.mxu0 0
    %421 = vmatpush1.bf16.msra.mxu0 0
    %422 = vmatprep.subr.bf16.mxu0 0
    %423 = vmatpush1.bf16.msra.mxu0 0
    %424 = vmatprep.subr.bf16.mxu0 0
    %425 = vmatpush1.bf16.msra.mxu0 0
    %426 = vmatprep.subr.bf16.mxu0 0
    %427 = vmatpush1.bf16.msra.mxu0 0
    %428 = vmatprep.subr.bf16.mxu0 0
    %429 = vmatpush1.bf16.msra.mxu0 0
    %430 = vmatprep.subr.bf16.mxu0 0
    %431 = vmatpush1.bf16.msra.mxu0 0
    %432 = vmatprep.subr.bf16.mxu0 0
    %433 = vmatpush1.bf16.msra.mxu0 0
    %434 = vmatprep.subr.bf16.mxu0 0
    %435 = vmatpush1.bf16.msra.mxu0 0
    %436 = vmatprep.subr.bf16.mxu0 0
    %437 = vmatpush1.bf16.msra.mxu0 0
    %438 = vmatprep.mubr.bf16.mxu0 0
    %439 = vmatmul.mubr.bf16.gmra.mrb[0].mxu0 %v404
    %v440 = vpop.f32.mrb[0].mxu0
    %v441 = vadd.f32 %v335, %v440
    %v442 = vpop.f32.mrb[0].mxu0
    %v443 = vadd.f32 %v337, %v442
    %v444 = vpop.f32.mrb[0].mxu0
    %v445 = vpop.f32.mrb[0].mxu0
    %446 = vdwg.mxu0
    %447 = vmatprep.subr.bf16.mxu0 %v397
    %448 = vmatpush1.bf16.msra.mxu0 %v396
    %449 = vmatprep.subr.bf16.mxu0 0
    %450 = vmatpush1.bf16.msra.mxu0 0
    %451 = vmatprep.subr.bf16.mxu0 0
    %452 = vmatpush1.bf16.msra.mxu0 0
    %453 = vmatprep.subr.bf16.mxu0 0
    %454 = vmatpush1.bf16.msra.mxu0 0
    %455 = vmatprep.subr.bf16.mxu0 0
    %456 = vmatpush1.bf16.msra.mxu0 0
    %457 = vmatprep.subr.bf16.mxu0 0
    %458 = vmatpush1.bf16.msra.mxu0 0
    %459 = vmatprep.subr.bf16.mxu0 0
    %460 = vmatpush1.bf16.msra.mxu0 0
    %461 = vmatprep.subr.bf16.mxu0 0
    %462 = vmatpush1.bf16.msra.mxu0 0
    %463 = vmatprep.subr.bf16.mxu0 0
    %464 = vmatpush1.bf16.msra.mxu0 0
    %465 = vmatprep.subr.bf16.mxu0 0
    %466 = vmatpush1.bf16.msra.mxu0 0
    %467 = vmatprep.subr.bf16.mxu0 0
    %468 = vmatpush1.bf16.msra.mxu0 0
    %469 = vmatprep.subr.bf16.mxu0 0
    %470 = vmatpush1.bf16.msra.mxu0 0
    %471 = vmatprep.subr.bf16.mxu0 0
    %472 = vmatpush1.bf16.msra.mxu0 0
    %473 = vmatprep.subr.bf16.mxu0 0
    %474 = vmatpush1.bf16.msra.mxu0 0
    %475 = vmatprep.subr.bf16.mxu0 0
    %476 = vmatpush1.bf16.msra.mxu0 0
    %477 = vmatprep.subr.bf16.mxu0 0
    %478 = vmatpush1.bf16.msra.mxu0 0
    %479 = vmatprep.mubr.bf16.mxu0 0
    %480 = vmatmul.mubr.bf16.gmra.mrb[0].mxu0 %v404
    %v481 = vpop.f32.mrb[0].mxu0
    %v482 = vadd.f32 %v376, %v481
    %v483 = vpop.f32.mrb[0].mxu0
    %v484 = vadd.f32 %v378, %v483
    %v485 = vpop.f32.mrb[0].mxu0
    %v486 = vpop.f32.mrb[0].mxu0
    %487 = vdwg.mxu0
    %v488 = vadd.f32 %v441, %v119
    %v489 = vadd.f32 %v443, %v123
    %v490 = vadd.f32 %v482, %v127
    %v491 = vadd.f32 %v484, %v131
    %v492 = vxor.u32 %v488, 2147483648
    %v493 = vmul.f32 %v492, 1.442695
    %v494 = vpow.pop %v493
    %v495 = vadd.f32 %v494, 1.0
    %v496 = vrcp.pop %v495
    %v497 = vmul.f32 1.0, %v496
    %v498 = vxor.u32 %v489, 2147483648
    %v499 = vmul.f32 %v498, 1.442695
    %v500 = vpow.pop %v499
    %v501 = vadd.f32 %v500, 1.0
    %v502 = vrcp.pop %v501
    %v503 = vmul.f32 1.0, %v502
    %v504 = vtanh.pop %v490
    %v505 = vxor.u32 %v491, 2147483648
    %v506 = vmul.f32 %v505, 1.442695
    %v507 = vpow.pop %v506
    %v508 = vadd.f32 %v507, 1.0
    %v509 = vrcp.pop %v508
    %v510 = vmul.f32 1.0, %v509
    %v511 = vmul.f32 %v503, %v137
    %v512 = vmul.f32 %v497, %v504
    %v513 = vadd.f32 %v511, %v512
    %v514 = vtanh.pop %v513
    %v515 = vmul.f32 %v510, %v514
    %516 = vst [vmem:[#allocation2] sm:$0x3] %v515
    %517 = vst [vmem:[#allocation3] sm:$0x3] %v513
    %v518 = vpack.c.bf16 %v515, %v515
    %519 = vst [vmem:[#allocation10] sm:$0x1] %v518
    %v520 = vld [vmem:[#allocation2] sm:$0x3]
    %v521 = vld [vmem:[#allocation3] sm:$0x3]
    %s522 = scalar_lea.vmem [#allocation4], 1
    %v523 = vld [vmem:[%s522] sm:$0x1]
    %v524 = vpack.c.bf16 %v520, %v520
    %525 = vmatprep.subr.bf16.mxu0 %v237
    %526 = vmatpush1.bf16.msra.mxu0 %v236
    %527 = vmatprep.subr.bf16.mxu0 %v241
    %528 = vmatpush1.bf16.msra.mxu0 %v240
    %529 = vmatprep.subr.bf16.mxu0 %v245
    %530 = vmatpush1.bf16.msra.mxu0 %v244
    %531 = vmatprep.subr.bf16.mxu0 %v249
    %532 = vmatpush1.bf16.msra.mxu0 %v248
    %533 = vmatprep.subr.bf16.mxu0 %v253
    %534 = vmatpush1.bf16.msra.mxu0 %v252
    %535 = vmatprep.subr.bf16.mxu0 %v257
    %536 = vmatpush1.bf16.msra.mxu0 %v256
    %537 = vmatprep.subr.bf16.mxu0 %v261
    %538 = vmatpush1.bf16.msra.mxu0 %v260
    %539 = vmatprep.subr.bf16.mxu0 %v265
    %540 = vmatpush1.bf16.msra.mxu0 %v264
    %541 = vmatprep.subr.bf16.mxu0 0
    %542 = vmatpush1.bf16.msra.mxu0 0
    %543 = vmatprep.subr.bf16.mxu0 0
    %544 = vmatpush1.bf16.msra.mxu0 0
    %545 = vmatprep.subr.bf16.mxu0 0
    %546 = vmatpush1.bf16.msra.mxu0 0
    %547 = vmatprep.subr.bf16.mxu0 0
    %548 = vmatpush1.bf16.msra.mxu0 0
    %549 = vmatprep.subr.bf16.mxu0 0
    %550 = vmatpush1.bf16.msra.mxu0 0
    %551 = vmatprep.subr.bf16.mxu0 0
    %552 = vmatpush1.bf16.msra.mxu0 0
    %553 = vmatprep.subr.bf16.mxu0 0
    %554 = vmatpush1.bf16.msra.mxu0 0
    %555 = vmatprep.subr.bf16.mxu0 0
    %556 = vmatpush1.bf16.msra.mxu0 0
    %557 = vmatprep.mubr.bf16.mxu0 0
    %558 = vmatmul.mubr.bf16.gmra.mrb[0].mxu0 %v524
    %v559 = vpop.f32.mrb[0].mxu0
    %v560 = vadd.f32 0.0, %v559
    %v561 = vpop.f32.mrb[0].mxu0
    %v562 = vadd.f32 0.0, %v561
    %v563 = vpop.f32.mrb[0].mxu0
    %v564 = vpop.f32.mrb[0].mxu0
    %565 = vdwg.mxu0
    %566 = vmatprep.subr.bf16.mxu0 %v239
    %567 = vmatpush1.bf16.msra.mxu0 %v238
    %568 = vmatprep.subr.bf16.mxu0 %v243
    %569 = vmatpush1.bf16.msra.mxu0 %v242
    %570 = vmatprep.subr.bf16.mxu0 %v247
    %571 = vmatpush1.bf16.msra.mxu0 %v246
    %572 = vmatprep.subr.bf16.mxu0 %v251
    %573 = vmatpush1.bf16.msra.mxu0 %v250
    %574 = vmatprep.subr.bf16.mxu0 %v255
    %575 = vmatpush1.bf16.msra.mxu0 %v254
    %576 = vmatprep.subr.bf16.mxu0 %v259
    %577 = vmatpush1.bf16.msra.mxu0 %v258
    %578 = vmatprep.subr.bf16.mxu0 %v263
    %579 = vmatpush1.bf16.msra.mxu0 %v262
    %580 = vmatprep.subr.bf16.mxu0 %v267
    %581 = vmatpush1.bf16.msra.mxu0 %v266
    %582 = vmatprep.subr.bf16.mxu0 0
    %583 = vmatpush1.bf16.msra.mxu0 0
    %584 = vmatprep.subr.bf16.mxu0 0
    %585 = vmatpush1.bf16.msra.mxu0 0
    %586 = vmatprep.subr.bf16.mxu0 0
    %587 = vmatpush1.bf16.msra.mxu0 0
    %588 = vmatprep.subr.bf16.mxu0 0
    %589 = vmatpush1.bf16.msra.mxu0 0
    %590 = vmatprep.subr.bf16.mxu0 0
    %591 = vmatpush1.bf16.msra.mxu0 0
    %592 = vmatprep.subr.bf16.mxu0 0
    %593 = vmatpush1.bf16.msra.mxu0 0
    %594 = vmatprep.subr.bf16.mxu0 0
    %595 = vmatpush1.bf16.msra.mxu0 0
    %596 = vmatprep.subr.bf16.mxu0 0
    %597 = vmatpush1.bf16.msra.mxu0 0
    %598 = vmatprep.mubr.bf16.mxu0 0
    %599 = vmatmul.mubr.bf16.gmra.mrb[0].mxu0 %v524
    %v600 = vpop.f32.mrb[0].mxu0
    %v601 = vadd.f32 0.0, %v600
    %v602 = vpop.f32.mrb[0].mxu0
    %v603 = vadd.f32 0.0, %v602
    %v604 = vpop.f32.mrb[0].mxu0
    %v605 = vpop.f32.mrb[0].mxu0
    %606 = vdwg.mxu0
    %v608 = vsel %vm402, %v523, 0
    %610 = vmatprep.subr.bf16.mxu0 %v395
    %611 = vmatpush1.bf16.msra.mxu0 %v394
    %612 = vmatprep.subr.bf16.mxu0 0
    %613 = vmatpush1.bf16.msra.mxu0 0
    %614 = vmatprep.subr.bf16.mxu0 0
    %615 = vmatpush1.bf16.msra.mxu0 0
    %616 = vmatprep.subr.bf16.mxu0 0
    %617 = vmatpush1.bf16.msra.mxu0 0
    %618 = vmatprep.subr.bf16.mxu0 0
    %619 = vmatpush1.bf16.msra.mxu0 0
    %620 = vmatprep.subr.bf16.mxu0 0
    %621 = vmatpush1.bf16.msra.mxu0 0
    %622 = vmatprep.subr.bf16.mxu0 0
    %623 = vmatpush1.bf16.msra.mxu0 0
    %624 = vmatprep.subr.bf16.mxu0 0
    %625 = vmatpush1.bf16.msra.mxu0 0
    %626 = vmatprep.subr.bf16.mxu0 0
    %627 = vmatpush1.bf16.msra.mxu0 0
    %628 = vmatprep.subr.bf16.mxu0 0
    %629 = vmatpush1.bf16.msra.mxu0 0
    %630 = vmatprep.subr.bf16.mxu0 0
    %631 = vmatpush1.bf16.msra.mxu0 0
    %632 = vmatprep.subr.bf16.mxu0 0
    %633 = vmatpush1.bf16.msra.mxu0 0
    %634 = vmatprep.subr.bf16.mxu0 0
    %635 = vmatpush1.bf16.msra.mxu0 0
    %636 = vmatprep.subr.bf16.mxu0 0
    %637 = vmatpush1.bf16.msra.mxu0 0
    %638 = vmatprep.subr.bf16.mxu0 0
    %639 = vmatpush1.bf16.msra.mxu0 0
    %640 = vmatprep.subr.bf16.mxu0 0
    %641 = vmatpush1.bf16.msra.mxu0 0
    %642 = vmatprep.mubr.bf16.mxu0 0
    %643 = vmatmul.mubr.bf16.gmra.mrb[0].mxu0 %v608
    %v644 = vpop.f32.mrb[0].mxu0
    %v645 = vadd.f32 %v560, %v644
    %v646 = vpop.f32.mrb[0].mxu0
    %v647 = vadd.f32 %v562, %v646
    %v648 = vpop.f32.mrb[0].mxu0
    %v649 = vpop.f32.mrb[0].mxu0
    %650 = vdwg.mxu0
    %651 = vmatprep.subr.bf16.mxu0 %v397
    %652 = vmatpush1.bf16.msra.mxu0 %v396
    %653 = vmatprep.subr.bf16.mxu0 0
    %654 = vmatpush1.bf16.msra.mxu0 0
    %655 = vmatprep.subr.bf16.mxu0 0
    %656 = vmatpush1.bf16.msra.mxu0 0
    %657 = vmatprep.subr.bf16.mxu0 0
    %658 = vmatpush1.bf16.msra.mxu0 0
    %659 = vmatprep.subr.bf16.mxu0 0
    %660 = vmatpush1.bf16.msra.mxu0 0
    %661 = vmatprep.subr.bf16.mxu0 0
    %662 = vmatpush1.bf16.msra.mxu0 0
    %663 = vmatprep.subr.bf16.mxu0 0
    %664 = vmatpush1.bf16.msra.mxu0 0
    %665 = vmatprep.subr.bf16.mxu0 0
    %666 = vmatpush1.bf16.msra.mxu0 0
    %667 = vmatprep.subr.bf16.mxu0 0
    %668 = vmatpush1.bf16.msra.mxu0 0
    %669 = vmatprep.subr.bf16.mxu0 0
    %670 = vmatpush1.bf16.msra.mxu0 0
    %671 = vmatprep.subr.bf16.mxu0 0
    %672 = vmatpush1.bf16.msra.mxu0 0
    %673 = vmatprep.subr.bf16.mxu0 0
    %674 = vmatpush1.bf16.msra.mxu0 0
    %675 = vmatprep.subr.bf16.mxu0 0
    %676 = vmatpush1.bf16.msra.mxu0 0
    %677 = vmatprep.subr.bf16.mxu0 0
    %678 = vmatpush1.bf16.msra.mxu0 0
    %679 = vmatprep.subr.bf16.mxu0 0
    %680 = vmatpush1.bf16.msra.mxu0 0
    %681 = vmatprep.subr.bf16.mxu0 0
    %682 = vmatpush1.bf16.msra.mxu0 0
    %683 = vmatprep.mubr.bf16.mxu0 0
    %684 = vmatmul.mubr.bf16.gmra.mrb[0].mxu0 %v608
    %v685 = vpop.f32.mrb[0].mxu0
    %v686 = vadd.f32 %v601, %v685
    %v687 = vpop.f32.mrb[0].mxu0
    %v688 = vadd.f32 %v603, %v687
    %v689 = vpop.f32.mrb[0].mxu0
    %v690 = vpop.f32.mrb[0].mxu0
    %691 = vdwg.mxu0
    %v692 = vadd.f32 %v645, %v119
    %v693 = vadd.f32 %v647, %v123
    %v694 = vadd.f32 %v686, %v127
    %v695 = vadd.f32 %v688, %v131
    %v696 = vxor.u32 %v692, 2147483648
    %v697 = vmul.f32 %v696, 1.442695
    %v698 = vpow.pop %v697
    %v699 = vadd.f32 %v698, 1.0
    %v700 = vrcp.pop %v699
    %v701 = vmul.f32 1.0, %v700
    %v702 = vxor.u32 %v693, 2147483648
    %v703 = vmul.f32 %v702, 1.442695
    %v704 = vpow.pop %v703
    %v705 = vadd.f32 %v704, 1.0
    %v706 = vrcp.pop %v705
    %v707 = vmul.f32 1.0, %v706
    %v708 = vtanh.pop %v694
    %v709 = vxor.u32 %v695, 2147483648
    %v710 = vmul.f32 %v709, 1.442695
    %v711 = vpow.pop %v710
    %v712 = vadd.f32 %v711, 1.0
    %v713 = vrcp.pop %v712
    %v714 = vmul.f32 1.0, %v713
    %v715 = vmul.f32 %v707, %v521
    %v716 = vmul.f32 %v701, %v708
    %v717 = vadd.f32 %v715, %v716
    %v718 = vtanh.pop %v717
    %v719 = vmul.f32 %v714, %v718
    %720 = vst [vmem:[#allocation2] sm:$0x3] %v719
    %721 = vst [vmem:[#allocation3] sm:$0x3] %v717
    %v722 = vpack.c.bf16 %v719, %v719
    %s723 = scalar_lea.vmem [#allocation10], 1
    %724 = vst [vmem:[%s723] sm:$0x1] %v722
    %v725 = vld [vmem:[#allocation2] sm:$0x3]
    %v726 = vld [vmem:[#allocation3] sm:$0x3]
    %s727 = scalar_lea.vmem [#allocation4], 2
    %v728 = vld [vmem:[%s727] sm:$0x1]
    %v729 = vpack.c.bf16 %v725, %v725
    %730 = vmatprep.subr.bf16.mxu0 %v237
    %731 = vmatpush1.bf16.msra.mxu0 %v236
    %732 = vmatprep.subr.bf16.mxu0 %v241
    %733 = vmatpush1.bf16.msra.mxu0 %v240
    %734 = vmatprep.subr.bf16.mxu0 %v245
    %735 = vmatpush1.bf16.msra.mxu0 %v244
    %736 = vmatprep.subr.bf16.mxu0 %v249
    %737 = vmatpush1.bf16.msra.mxu0 %v248
    %738 = vmatprep.subr.bf16.mxu0 %v253
    %739 = vmatpush1.bf16.msra.mxu0 %v252
    %740 = vmatprep.subr.bf16.mxu0 %v257
    %741 = vmatpush1.bf16.msra.mxu0 %v256
    %742 = vmatprep.subr.bf16.mxu0 %v261
    %743 = vmatpush1.bf16.msra.mxu0 %v260
    %744 = vmatprep.subr.bf16.mxu0 %v265
    %745 = vmatpush1.bf16.msra.mxu0 %v264
    %746 = vmatprep.subr.bf16.mxu0 0
    %747 = vmatpush1.bf16.msra.mxu0 0
    %748 = vmatprep.subr.bf16.mxu0 0
    %749 = vmatpush1.bf16.msra.mxu0 0
    %750 = vmatprep.subr.bf16.mxu0 0
    %751 = vmatpush1.bf16.msra.mxu0 0
    %752 = vmatprep.subr.bf16.mxu0 0
    %753 = vmatpush1.bf16.msra.mxu0 0
    %754 = vmatprep.subr.bf16.mxu0 0
    %755 = vmatpush1.bf16.msra.mxu0 0
    %756 = vmatprep.subr.bf16.mxu0 0
    %757 = vmatpush1.bf16.msra.mxu0 0
    %758 = vmatprep.subr.bf16.mxu0 0
    %759 = vmatpush1.bf16.msra.mxu0 0
    %760 = vmatprep.subr.bf16.mxu0 0
    %761 = vmatpush1.bf16.msra.mxu0 0
    %762 = vmatprep.mubr.bf16.mxu0 0
    %763 = vmatmul.mubr.bf16.gmra.mrb[0].mxu0 %v729
    %v764 = vpop.f32.mrb[0].mxu0
    %v765 = vadd.f32 0.0, %v764
    %v766 = vpop.f32.mrb[0].mxu0
    %v767 = vadd.f32 0.0, %v766
    %v768 = vpop.f32.mrb[0].mxu0
    %v769 = vpop.f32.mrb[0].mxu0
    %770 = vdwg.mxu0
    %771 = vmatprep.subr.bf16.mxu0 %v239
    %772 = vmatpush1.bf16.msra.mxu0 %v238
    %773 = vmatprep.subr.bf16.mxu0 %v243
    %774 = vmatpush1.bf16.msra.mxu0 %v242
    %775 = vmatprep.subr.bf16.mxu0 %v247
    %776 = vmatpush1.bf16.msra.mxu0 %v246
    %777 = vmatprep.subr.bf16.mxu0 %v251
    %778 = vmatpush1.bf16.msra.mxu0 %v250
    %779 = vmatprep.subr.bf16.mxu0 %v255
    %780 = vmatpush1.bf16.msra.mxu0 %v254
    %781 = vmatprep.subr.bf16.mxu0 %v259
    %782 = vmatpush1.bf16.msra.mxu0 %v258
    %783 = vmatprep.subr.bf16.mxu0 %v263
    %784 = vmatpush1.bf16.msra.mxu0 %v262
    %785 = vmatprep.subr.bf16.mxu0 %v267
    %786 = vmatpush1.bf16.msra.mxu0 %v266
    %787 = vmatprep.subr.bf16.mxu0 0
    %788 = vmatpush1.bf16.msra.mxu0 0
    %789 = vmatprep.subr.bf16.mxu0 0
    %790 = vmatpush1.bf16.msra.mxu0 0
    %791 = vmatprep.subr.bf16.mxu0 0
    %792 = vmatpush1.bf16.msra.mxu0 0
    %793 = vmatprep.subr.bf16.mxu0 0
    %794 = vmatpush1.bf16.msra.mxu0 0
    %795 = vmatprep.subr.bf16.mxu0 0
    %796 = vmatpush1.bf16.msra.mxu0 0
    %797 = vmatprep.subr.bf16.mxu0 0
    %798 = vmatpush1.bf16.msra.mxu0 0
    %799 = vmatprep.subr.bf16.mxu0 0
    %800 = vmatpush1.bf16.msra.mxu0 0
    %801 = vmatprep.subr.bf16.mxu0 0
    %802 = vmatpush1.bf16.msra.mxu0 0
    %803 = vmatprep.mubr.bf16.mxu0 0
    %804 = vmatmul.mubr.bf16.gmra.mrb[0].mxu0 %v729
    %v805 = vpop.f32.mrb[0].mxu0
    %v806 = vadd.f32 0.0, %v805
    %v807 = vpop.f32.mrb[0].mxu0
    %v808 = vadd.f32 0.0, %v807
    %v809 = vpop.f32.mrb[0].mxu0
    %v810 = vpop.f32.mrb[0].mxu0
    %811 = vdwg.mxu0
    %v813 = vsel %vm402, %v728, 0
    %815 = vmatprep.subr.bf16.mxu0 %v395
    %816 = vmatpush1.bf16.msra.mxu0 %v394
    %817 = vmatprep.subr.bf16.mxu0 0
    %818 = vmatpush1.bf16.msra.mxu0 0
    %819 = vmatprep.subr.bf16.mxu0 0
    %820 = vmatpush1.bf16.msra.mxu0 0
    %821 = vmatprep.subr.bf16.mxu0 0
    %822 = vmatpush1.bf16.msra.mxu0 0
    %823 = vmatprep.subr.bf16.mxu0 0
    %824 = vmatpush1.bf16.msra.mxu0 0
    %825 = vmatprep.subr.bf16.mxu0 0
    %826 = vmatpush1.bf16.msra.mxu0 0
    %827 = vmatprep.subr.bf16.mxu0 0
    %828 = vmatpush1.bf16.msra.mxu0 0
    %829 = vmatprep.subr.bf16.mxu0 0
    %830 = vmatpush1.bf16.msra.mxu0 0
    %831 = vmatprep.subr.bf16.mxu0 0
    %832 = vmatpush1.bf16.msra.mxu0 0
    %833 = vmatprep.subr.bf16.mxu0 0
    %834 = vmatpush1.bf16.msra.mxu0 0
    %835 = vmatprep.subr.bf16.mxu0 0
    %836 = vmatpush1.bf16.msra.mxu0 0
    %837 = vmatprep.subr.bf16.mxu0 0
    %838 = vmatpush1.bf16.msra.mxu0 0
    %839 = vmatprep.subr.bf16.mxu0 0
    %840 = vmatpush1.bf16.msra.mxu0 0
    %841 = vmatprep.subr.bf16.mxu0 0
    %842 = vmatpush1.bf16.msra.mxu0 0
    %843 = vmatprep.subr.bf16.mxu0 0
    %844 = vmatpush1.bf16.msra.mxu0 0
    %845 = vmatprep.subr.bf16.mxu0 0
    %846 = vmatpush1.bf16.msra.mxu0 0
    %847 = vmatprep.mubr.bf16.mxu0 0
    %848 = vmatmul.mubr.bf16.gmra.mrb[0].mxu0 %v813
    %v849 = vpop.f32.mrb[0].mxu0
    %v850 = vadd.f32 %v765, %v849
    %v851 = vpop.f32.mrb[0].mxu0
    %v852 = vadd.f32 %v767, %v851
    %v853 = vpop.f32.mrb[0].mxu0
    %v854 = vpop.f32.mrb[0].mxu0
    %855 = vdwg.mxu0
    %856 = vmatprep.subr.bf16.mxu0 %v397
    %857 = vmatpush1.bf16.msra.mxu0 %v396
    %858 = vmatprep.subr.bf16.mxu0 0
    %859 = vmatpush1.bf16.msra.mxu0 0
    %860 = vmatprep.subr.bf16.mxu0 0
    %861 = vmatpush1.bf16.msra.mxu0 0
    %862 = vmatprep.subr.bf16.mxu0 0
    %863 = vmatpush1.bf16.msra.mxu0 0
    %864 = vmatprep.subr.bf16.mxu0 0
    %865 = vmatpush1.bf16.msra.mxu0 0
    %866 = vmatprep.subr.bf16.mxu0 0
    %867 = vmatpush1.bf16.msra.mxu0 0
    %868 = vmatprep.subr.bf16.mxu0 0
    %869 = vmatpush1.bf16.msra.mxu0 0
    %870 = vmatprep.subr.bf16.mxu0 0
    %871 = vmatpush1.bf16.msra.mxu0 0
    %872 = vmatprep.subr.bf16.mxu0 0
    %873 = vmatpush1.bf16.msra.mxu0 0
    %874 = vmatprep.subr.bf16.mxu0 0
    %875 = vmatpush1.bf16.msra.mxu0 0
    %876 = vmatprep.subr.bf16.mxu0 0
    %877 = vmatpush1.bf16.msra.mxu0 0
    %878 = vmatprep.subr.bf16.mxu0 0
    %879 = vmatpush1.bf16.msra.mxu0 0
    %880 = vmatprep.subr.bf16.mxu0 0
    %881 = vmatpush1.bf16.msra.mxu0 0
    %882 = vmatprep.subr.bf16.mxu0 0
    %883 = vmatpush1.bf16.msra.mxu0 0
    %884 = vmatprep.subr.bf16.mxu0 0
    %885 = vmatpush1.bf16.msra.mxu0 0
    %886 = vmatprep.subr.bf16.mxu0 0
    %887 = vmatpush1.bf16.msra.mxu0 0
    %888 = vmatprep.mubr.bf16.mxu0 0
    %889 = vmatmul.mubr.bf16.gmra.mrb[0].mxu0 %v813
    %v890 = vpop.f32.mrb[0].mxu0
    %v891 = vadd.f32 %v806, %v890
    %v892 = vpop.f32.mrb[0].mxu0
    %v893 = vadd.f32 %v808, %v892
    %v894 = vpop.f32.mrb[0].mxu0
    %v895 = vpop.f32.mrb[0].mxu0
    %896 = vdwg.mxu0
    %v897 = vadd.f32 %v850, %v119
    %v898 = vadd.f32 %v852, %v123
    %v899 = vadd.f32 %v891, %v127
    %v900 = vadd.f32 %v893, %v131
    %v901 = vxor.u32 %v897, 2147483648
    %v902 = vmul.f32 %v901, 1.442695
    %v903 = vpow.pop %v902
    %v904 = vadd.f32 %v903, 1.0
    %v905 = vrcp.pop %v904
    %v906 = vmul.f32 1.0, %v905
    %v907 = vxor.u32 %v898, 2147483648
    %v908 = vmul.f32 %v907, 1.442695
    %v909 = vpow.pop %v908
    %v910 = vadd.f32 %v909, 1.0
    %v911 = vrcp.pop %v910
    %v912 = vmul.f32 1.0, %v911
    %v913 = vtanh.pop %v899
    %v914 = vxor.u32 %v900, 2147483648
    %v915 = vmul.f32 %v914, 1.442695
    %v916 = vpow.pop %v915
    %v917 = vadd.f32 %v916, 1.0
    %v918 = vrcp.pop %v917
    %v919 = vmul.f32 1.0, %v918
    %v920 = vmul.f32 %v912, %v726
    %v921 = vmul.f32 %v906, %v913
    %v922 = vadd.f32 %v920, %v921
    %v923 = vtanh.pop %v922
    %v924 = vmul.f32 %v919, %v923
    %925 = vst [vmem:[#allocation2] sm:$0x3] %v924
    %926 = vst [vmem:[#allocation3] sm:$0x3] %v922
    %v927 = vpack.c.bf16 %v924, %v924
    %s928 = scalar_lea.vmem [#allocation10], 2
    %929 = vst [vmem:[%s928] sm:$0x1] %v927
    %v930 = vld [vmem:[#allocation2] sm:$0x3]
    %v931 = vld [vmem:[#allocation3] sm:$0x3]
    %s932 = scalar_lea.vmem [#allocation4], 3
    %v933 = vld [vmem:[%s932] sm:$0x1]
    %v934 = vpack.c.bf16 %v930, %v930
    %935 = vmatprep.subr.bf16.mxu0 %v237
    %936 = vmatpush1.bf16.msra.mxu0 %v236
    %937 = vmatprep.subr.bf16.mxu0 %v241
    %938 = vmatpush1.bf16.msra.mxu0 %v240
    %939 = vmatprep.subr.bf16.mxu0 %v245
    %940 = vmatpush1.bf16.msra.mxu0 %v244
    %941 = vmatprep.subr.bf16.mxu0 %v249
    %942 = vmatpush1.bf16.msra.mxu0 %v248
    %943 = vmatprep.subr.bf16.mxu0 %v253
    %944 = vmatpush1.bf16.msra.mxu0 %v252
    %945 = vmatprep.subr.bf16.mxu0 %v257
    %946 = vmatpush1.bf16.msra.mxu0 %v256
    %947 = vmatprep.subr.bf16.mxu0 %v261
    %948 = vmatpush1.bf16.msra.mxu0 %v260
    %949 = vmatprep.subr.bf16.mxu0 %v265
    %950 = vmatpush1.bf16.msra.mxu0 %v264
    %951 = vmatprep.subr.bf16.mxu0 0
    %952 = vmatpush1.bf16.msra.mxu0 0
    %953 = vmatprep.subr.bf16.mxu0 0
    %954 = vmatpush1.bf16.msra.mxu0 0
    %955 = vmatprep.subr.bf16.mxu0 0
    %956 = vmatpush1.bf16.msra.mxu0 0
    %957 = vmatprep.subr.bf16.mxu0 0
    %958 = vmatpush1.bf16.msra.mxu0 0
    %959 = vmatprep.subr.bf16.mxu0 0
    %960 = vmatpush1.bf16.msra.mxu0 0
    %961 = vmatprep.subr.bf16.mxu0 0
    %962 = vmatpush1.bf16.msra.mxu0 0
    %963 = vmatprep.subr.bf16.mxu0 0
    %964 = vmatpush1.bf16.msra.mxu0 0
    %965 = vmatprep.subr.bf16.mxu0 0
    %966 = vmatpush1.bf16.msra.mxu0 0
    %967 = vmatprep.mubr.bf16.mxu0 0
    %968 = vmatmul.mubr.bf16.gmra.mrb[0].mxu0 %v934
    %v969 = vpop.f32.mrb[0].mxu0
    %v970 = vadd.f32 0.0, %v969
    %v971 = vpop.f32.mrb[0].mxu0
    %v972 = vadd.f32 0.0, %v971
    %v973 = vpop.f32.mrb[0].mxu0
    %v974 = vpop.f32.mrb[0].mxu0
    %975 = vdwg.mxu0
    %976 = vmatprep.subr.bf16.mxu0 %v239
    %977 = vmatpush1.bf16.msra.mxu0 %v238
    %978 = vmatprep.subr.bf16.mxu0 %v243
    %979 = vmatpush1.bf16.msra.mxu0 %v242
    %980 = vmatprep.subr.bf16.mxu0 %v247
    %981 = vmatpush1.bf16.msra.mxu0 %v246
    %982 = vmatprep.subr.bf16.mxu0 %v251
    %983 = vmatpush1.bf16.msra.mxu0 %v250
    %984 = vmatprep.subr.bf16.mxu0 %v255
    %985 = vmatpush1.bf16.msra.mxu0 %v254
    %986 = vmatprep.subr.bf16.mxu0 %v259
    %987 = vmatpush1.bf16.msra.mxu0 %v258
    %988 = vmatprep.subr.bf16.mxu0 %v263
    %989 = vmatpush1.bf16.msra.mxu0 %v262
    %990 = vmatprep.subr.bf16.mxu0 %v267
    %991 = vmatpush1.bf16.msra.mxu0 %v266
    %992 = vmatprep.subr.bf16.mxu0 0
    %993 = vmatpush1.bf16.msra.mxu0 0
    %994 = vmatprep.subr.bf16.mxu0 0
    %995 = vmatpush1.bf16.msra.mxu0 0
    %996 = vmatprep.subr.bf16.mxu0 0
    %997 = vmatpush1.bf16.msra.mxu0 0
    %998 = vmatprep.subr.bf16.mxu0 0
    %999 = vmatpush1.bf16.msra.mxu0 0
    %1000 = vmatprep.subr.bf16.mxu0 0
    %1001 = vmatpush1.bf16.msra.mxu0 0
    %1002 = vmatprep.subr.bf16.mxu0 0
    %1003 = vmatpush1.bf16.msra.mxu0 0
    %1004 = vmatprep.subr.bf16.mxu0 0
    %1005 = vmatpush1.bf16.msra.mxu0 0
    %1006 = vmatprep.subr.bf16.mxu0 0
    %1007 = vmatpush1.bf16.msra.mxu0 0
    %1008 = vmatprep.mubr.bf16.mxu0 0
    %1009 = vmatmul.mubr.bf16.gmra.mrb[0].mxu0 %v934
    %v1010 = vpop.f32.mrb[0].mxu0
    %v1011 = vadd.f32 0.0, %v1010
    %v1012 = vpop.f32.mrb[0].mxu0
    %v1013 = vadd.f32 0.0, %v1012
    %v1014 = vpop.f32.mrb[0].mxu0
    %v1015 = vpop.f32.mrb[0].mxu0
    %1016 = vdwg.mxu0
    %v1018 = vsel %vm402, %v933, 0
    %1020 = vmatprep.subr.bf16.mxu0 %v395
    %1021 = vmatpush1.bf16.msra.mxu0 %v394
    %1022 = vmatprep.subr.bf16.mxu0 0
    %1023 = vmatpush1.bf16.msra.mxu0 0
    %1024 = vmatprep.subr.bf16.mxu0 0
    %1025 = vmatpush1.bf16.msra.mxu0 0
    %1026 = vmatprep.subr.bf16.mxu0 0
    %1027 = vmatpush1.bf16.msra.mxu0 0
    %1028 = vmatprep.subr.bf16.mxu0 0
    %1029 = vmatpush1.bf16.msra.mxu0 0
    %1030 = vmatprep.subr.bf16.mxu0 0
    %1031 = vmatpush1.bf16.msra.mxu0 0
    %1032 = vmatprep.subr.bf16.mxu0 0
    %1033 = vmatpush1.bf16.msra.mxu0 0
    %1034 = vmatprep.subr.bf16.mxu0 0
    %1035 = vmatpush1.bf16.msra.mxu0 0
    %1036 = vmatprep.subr.bf16.mxu0 0
    %1037 = vmatpush1.bf16.msra.mxu0 0
    %1038 = vmatprep.subr.bf16.mxu0 0
    %1039 = vmatpush1.bf16.msra.mxu0 0
    %1040 = vmatprep.subr.bf16.mxu0 0
    %1041 = vmatpush1.bf16.msra.mxu0 0
    %1042 = vmatprep.subr.bf16.mxu0 0
    %1043 = vmatpush1.bf16.msra.mxu0 0
    %1044 = vmatprep.subr.bf16.mxu0 0
    %1045 = vmatpush1.bf16.msra.mxu0 0
    %1046 = vmatprep.subr.bf16.mxu0 0
    %1047 = vmatpush1.bf16.msra.mxu0 0
    %1048 = vmatprep.subr.bf16.mxu0 0
    %1049 = vmatpush1.bf16.msra.mxu0 0
    %1050 = vmatprep.subr.bf16.mxu0 0
    %1051 = vmatpush1.bf16.msra.mxu0 0
    %1052 = vmatprep.mubr.bf16.mxu0 0
    %1053 = vmatmul.mubr.bf16.gmra.mrb[0].mxu0 %v1018
    %v1054 = vpop.f32.mrb[0].mxu0
    %v1055 = vadd.f32 %v970, %v1054
    %v1056 = vpop.f32.mrb[0].mxu0
    %v1057 = vadd.f32 %v972, %v1056
    %v1058 = vpop.f32.mrb[0].mxu0
    %v1059 = vpop.f32.mrb[0].mxu0
    %1060 = vdwg.mxu0
    %1061 = vmatprep.subr.bf16.mxu0 %v397
    %1062 = vmatpush1.bf16.msra.mxu0 %v396
    %1063 = vmatprep.subr.bf16.mxu0 0
    %1064 = vmatpush1.bf16.msra.mxu0 0
    %1065 = vmatprep.subr.bf16.mxu0 0
    %1066 = vmatpush1.bf16.msra.mxu0 0
    %1067 = vmatprep.subr.bf16.mxu0 0
    %1068 = vmatpush1.bf16.msra.mxu0 0
    %1069 = vmatprep.subr.bf16.mxu0 0
    %1070 = vmatpush1.bf16.msra.mxu0 0
    %1071 = vmatprep.subr.bf16.mxu0 0
    %1072 = vmatpush1.bf16.msra.mxu0 0
    %1073 = vmatprep.subr.bf16.mxu0 0
    %1074 = vmatpush1.bf16.msra.mxu0 0
    %1075 = vmatprep.subr.bf16.mxu0 0
    %1076 = vmatpush1.bf16.msra.mxu0 0
    %1077 = vmatprep.subr.bf16.mxu0 0
    %1078 = vmatpush1.bf16.msra.mxu0 0
    %1079 = vmatprep.subr.bf16.mxu0 0
    %1080 = vmatpush1.bf16.msra.mxu0 0
    %1081 = vmatprep.subr.bf16.mxu0 0
    %1082 = vmatpush1.bf16.msra.mxu0 0
    %1083 = vmatprep.subr.bf16.mxu0 0
    %1084 = vmatpush1.bf16.msra.mxu0 0
    %1085 = vmatprep.subr.bf16.mxu0 0
    %1086 = vmatpush1.bf16.msra.mxu0 0
    %1087 = vmatprep.subr.bf16.mxu0 0
    %1088 = vmatpush1.bf16.msra.mxu0 0
    %1089 = vmatprep.subr.bf16.mxu0 0
    %1090 = vmatpush1.bf16.msra.mxu0 0
    %1091 = vmatprep.subr.bf16.mxu0 0
    %1092 = vmatpush1.bf16.msra.mxu0 0
    %1093 = vmatprep.mubr.bf16.mxu0 0
    %1094 = vmatmul.mubr.bf16.gmra.mrb[0].mxu0 %v1018
    %v1095 = vpop.f32.mrb[0].mxu0
    %v1096 = vadd.f32 %v1011, %v1095
    %v1097 = vpop.f32.mrb[0].mxu0
    %v1098 = vadd.f32 %v1013, %v1097
    %v1099 = vpop.f32.mrb[0].mxu0
    %v1100 = vpop.f32.mrb[0].mxu0
    %1101 = vdwg.mxu0
    %v1102 = vadd.f32 %v1055, %v119
    %v1103 = vadd.f32 %v1057, %v123
    %v1104 = vadd.f32 %v1096, %v127
    %v1105 = vadd.f32 %v1098, %v131
    %v1106 = vxor.u32 %v1102, 2147483648
    %v1107 = vmul.f32 %v1106, 1.442695
    %v1108 = vpow.pop %v1107
    %v1109 = vadd.f32 %v1108, 1.0
    %v1110 = vrcp.pop %v1109
    %v1111 = vmul.f32 1.0, %v1110
    %v1112 = vxor.u32 %v1103, 2147483648
    %v1113 = vmul.f32 %v1112, 1.442695
    %v1114 = vpow.pop %v1113
    %v1115 = vadd.f32 %v1114, 1.0
    %v1116 = vrcp.pop %v1115
    %v1117 = vmul.f32 1.0, %v1116
    %v1118 = vtanh.pop %v1104
    %v1119 = vxor.u32 %v1105, 2147483648
    %v1120 = vmul.f32 %v1119, 1.442695
    %v1121 = vpow.pop %v1120
    %v1122 = vadd.f32 %v1121, 1.0
    %v1123 = vrcp.pop %v1122
    %v1124 = vmul.f32 1.0, %v1123
    %v1125 = vmul.f32 %v1117, %v931
    %v1126 = vmul.f32 %v1111, %v1118
    %v1127 = vadd.f32 %v1125, %v1126
    %v1128 = vtanh.pop %v1127
    %v1129 = vmul.f32 %v1124, %v1128
    %1130 = vst [vmem:[#allocation2] sm:$0x3] %v1129
    %1131 = vst [vmem:[#allocation3] sm:$0x3] %v1127
    %v1132 = vpack.c.bf16 %v1129, %v1129
    %s1133 = scalar_lea.vmem [#allocation10], 3
    %1134 = vst [vmem:[%s1133] sm:$0x1] %v1132
    %v1135 = vld [vmem:[#allocation2] sm:$0x3]
    %v1136 = vld [vmem:[#allocation3] sm:$0x3]
    %s1137 = scalar_lea.vmem [#allocation4], 4
    %v1138 = vld [vmem:[%s1137] sm:$0x1]
    %v1139 = vpack.c.bf16 %v1135, %v1135
    %1140 = vmatprep.subr.bf16.mxu0 %v237
    %1141 = vmatpush1.bf16.msra.mxu0 %v236
    %1142 = vmatprep.subr.bf16.mxu0 %v241
    %1143 = vmatpush1.bf16.msra.mxu0 %v240
    %1144 = vmatprep.subr.bf16.mxu0 %v245
    %1145 = vmatpush1.bf16.msra.mxu0 %v244
    %1146 = vmatprep.subr.bf16.mxu0 %v249
    %1147 = vmatpush1.bf16.msra.mxu0 %v248
    %1148 = vmatprep.subr.bf16.mxu0 %v253
    %1149 = vmatpush1.bf16.msra.mxu0 %v252
    %1150 = vmatprep.subr.bf16.mxu0 %v257
    %1151 = vmatpush1.bf16.msra.mxu0 %v256
    %1152 = vmatprep.subr.bf16.mxu0 %v261
    %1153 = vmatpush1.bf16.msra.mxu0 %v260
    %1154 = vmatprep.subr.bf16.mxu0 %v265
    %1155 = vmatpush1.bf16.msra.mxu0 %v264
    %1156 = vmatprep.subr.bf16.mxu0 0
    %1157 = vmatpush1.bf16.msra.mxu0 0
    %1158 = vmatprep.subr.bf16.mxu0 0
    %1159 = vmatpush1.bf16.msra.mxu0 0
    %1160 = vmatprep.subr.bf16.mxu0 0
    %1161 = vmatpush1.bf16.msra.mxu0 0
    %1162 = vmatprep.subr.bf16.mxu0 0
    %1163 = vmatpush1.bf16.msra.mxu0 0
    %1164 = vmatprep.subr.bf16.mxu0 0
    %1165 = vmatpush1.bf16.msra.mxu0 0
    %1166 = vmatprep.subr.bf16.mxu0 0
    %1167 = vmatpush1.bf16.msra.mxu0 0
    %1168 = vmatprep.subr.bf16.mxu0 0
    %1169 = vmatpush1.bf16.msra.mxu0 0
    %1170 = vmatprep.subr.bf16.mxu0 0
    %1171 = vmatpush1.bf16.msra.mxu0 0
    %1172 = vmatprep.mubr.bf16.mxu0 0
    %1173 = vmatmul.mubr.bf16.gmra.mrb[0].mxu0 %v1139
    %v1174 = vpop.f32.mrb[0].mxu0
    %v1175 = vadd.f32 0.0, %v1174
    %v1176 = vpop.f32.mrb[0].mxu0
    %v1177 = vadd.f32 0.0, %v1176
    %v1178 = vpop.f32.mrb[0].mxu0
    %v1179 = vpop.f32.mrb[0].mxu0
    %1180 = vdwg.mxu0
    %1181 = vmatprep.subr.bf16.mxu0 %v239
    %1182 = vmatpush1.bf16.msra.mxu0 %v238
    %1183 = vmatprep.subr.bf16.mxu0 %v243
    %1184 = vmatpush1.bf16.msra.mxu0 %v242
    %1185 = vmatprep.subr.bf16.mxu0 %v247
    %1186 = vmatpush1.bf16.msra.mxu0 %v246
    %1187 = vmatprep.subr.bf16.mxu0 %v251
    %1188 = vmatpush1.bf16.msra.mxu0 %v250
    %1189 = vmatprep.subr.bf16.mxu0 %v255
    %1190 = vmatpush1.bf16.msra.mxu0 %v254
    %1191 = vmatprep.subr.bf16.mxu0 %v259
    %1192 = vmatpush1.bf16.msra.mxu0 %v258
    %1193 = vmatprep.subr.bf16.mxu0 %v263
    %1194 = vmatpush1.bf16.msra.mxu0 %v262
    %1195 = vmatprep.subr.bf16.mxu0 %v267
    %1196 = vmatpush1.bf16.msra.mxu0 %v266
    %1197 = vmatprep.subr.bf16.mxu0 0
    %1198 = vmatpush1.bf16.msra.mxu0 0
    %1199 = vmatprep.subr.bf16.mxu0 0
    %1200 = vmatpush1.bf16.msra.mxu0 0
    %1201 = vmatprep.subr.bf16.mxu0 0
    %1202 = vmatpush1.bf16.msra.mxu0 0
    %1203 = vmatprep.subr.bf16.mxu0 0
    %1204 = vmatpush1.bf16.msra.mxu0 0
    %1205 = vmatprep.subr.bf16.mxu0 0
    %1206 = vmatpush1.bf16.msra.mxu0 0
    %1207 = vmatprep.subr.bf16.mxu0 0
    %1208 = vmatpush1.bf16.msra.mxu0 0
    %1209 = vmatprep.subr.bf16.mxu0 0
    %1210 = vmatpush1.bf16.msra.mxu0 0
    %1211 = vmatprep.subr.bf16.mxu0 0
    %1212 = vmatpush1.bf16.msra.mxu0 0
    %1213 = vmatprep.mubr.bf16.mxu0 0
    %1214 = vmatmul.mubr.bf16.gmra.mrb[0].mxu0 %v1139
    %v1215 = vpop.f32.mrb[0].mxu0
    %v1216 = vadd.f32 0.0, %v1215
    %v1217 = vpop.f32.mrb[0].mxu0
    %v1218 = vadd.f32 0.0, %v1217
    %v1219 = vpop.f32.mrb[0].mxu0
    %v1220 = vpop.f32.mrb[0].mxu0
    %1221 = vdwg.mxu0
    %v1223 = vsel %vm402, %v1138, 0
    %1225 = vmatprep.subr.bf16.mxu0 %v395
    %1226 = vmatpush1.bf16.msra.mxu0 %v394
    %1227 = vmatprep.subr.bf16.mxu0 0
    %1228 = vmatpush1.bf16.msra.mxu0 0
    %1229 = vmatprep.subr.bf16.mxu0 0
    %1230 = vmatpush1.bf16.msra.mxu0 0
    %1231 = vmatprep.subr.bf16.mxu0 0
    %1232 = vmatpush1.bf16.msra.mxu0 0
    %1233 = vmatprep.subr.bf16.mxu0 0
    %1234 = vmatpush1.bf16.msra.mxu0 0
    %1235 = vmatprep.subr.bf16.mxu0 0
    %1236 = vmatpush1.bf16.msra.mxu0 0
    %1237 = vmatprep.subr.bf16.mxu0 0
    %1238 = vmatpush1.bf16.msra.mxu0 0
    %1239 = vmatprep.subr.bf16.mxu0 0
    %1240 = vmatpush1.bf16.msra.mxu0 0
    %1241 = vmatprep.subr.bf16.mxu0 0
    %1242 = vmatpush1.bf16.msra.mxu0 0
    %1243 = vmatprep.subr.bf16.mxu0 0
    %1244 = vmatpush1.bf16.msra.mxu0 0
    %1245 = vmatprep.subr.bf16.mxu0 0
    %1246 = vmatpush1.bf16.msra.mxu0 0
    %1247 = vmatprep.subr.bf16.mxu0 0
    %1248 = vmatpush1.bf16.msra.mxu0 0
    %1249 = vmatprep.subr.bf16.mxu0 0
    %1250 = vmatpush1.bf16.msra.mxu0 0
    %1251 = vmatprep.subr.bf16.mxu0 0
    %1252 = vmatpush1.bf16.msra.mxu0 0
    %1253 = vmatprep.subr.bf16.mxu0 0
    %1254 = vmatpush1.bf16.msra.mxu0 0
    %1255 = vmatprep.subr.bf16.mxu0 0
    %1256 = vmatpush1.bf16.msra.mxu0 0
    %1257 = vmatprep.mubr.bf16.mxu0 0
    %1258 = vmatmul.mubr.bf16.gmra.mrb[0].mxu0 %v1223
    %v1259 = vpop.f32.mrb[0].mxu0
    %v1260 = vadd.f32 %v1175, %v1259
    %v1261 = vpop.f32.mrb[0].mxu0
    %v1262 = vadd.f32 %v1177, %v1261
    %v1263 = vpop.f32.mrb[0].mxu0
    %v1264 = vpop.f32.mrb[0].mxu0
    %1265 = vdwg.mxu0
    %1266 = vmatprep.subr.bf16.mxu0 %v397
    %1267 = vmatpush1.bf16.msra.mxu0 %v396
    %1268 = vmatprep.subr.bf16.mxu0 0
    %1269 = vmatpush1.bf16.msra.mxu0 0
    %1270 = vmatprep.subr.bf16.mxu0 0
    %1271 = vmatpush1.bf16.msra.mxu0 0
    %1272 = vmatprep.subr.bf16.mxu0 0
    %1273 = vmatpush1.bf16.msra.mxu0 0
    %1274 = vmatprep.subr.bf16.mxu0 0
    %1275 = vmatpush1.bf16.msra.mxu0 0
    %1276 = vmatprep.subr.bf16.mxu0 0
    %1277 = vmatpush1.bf16.msra.mxu0 0
    %1278 = vmatprep.subr.bf16.mxu0 0
    %1279 = vmatpush1.bf16.msra.mxu0 0
    %1280 = vmatprep.subr.bf16.mxu0 0
    %1281 = vmatpush1.bf16.msra.mxu0 0
    %1282 = vmatprep.subr.bf16.mxu0 0
    %1283 = vmatpush1.bf16.msra.mxu0 0
    %1284 = vmatprep.subr.bf16.mxu0 0
    %1285 = vmatpush1.bf16.msra.mxu0 0
    %1286 = vmatprep.subr.bf16.mxu0 0
    %1287 = vmatpush1.bf16.msra.mxu0 0
    %1288 = vmatprep.subr.bf16.mxu0 0
    %1289 = vmatpush1.bf16.msra.mxu0 0
    %1290 = vmatprep.subr.bf16.mxu0 0
    %1291 = vmatpush1.bf16.msra.mxu0 0
    %1292 = vmatprep.subr.bf16.mxu0 0
    %1293 = vmatpush1.bf16.msra.mxu0 0
    %1294 = vmatprep.subr.bf16.mxu0 0
    %1295 = vmatpush1.bf16.msra.mxu0 0
    %1296 = vmatprep.subr.bf16.mxu0 0
    %1297 = vmatpush1.bf16.msra.mxu0 0
    %1298 = vmatprep.mubr.bf16.mxu0 0
    %1299 = vmatmul.mubr.bf16.gmra.mrb[0].mxu0 %v1223
    %v1300 = vpop.f32.mrb[0].mxu0
    %v1301 = vadd.f32 %v1216, %v1300
    %v1302 = vpop.f32.mrb[0].mxu0
    %v1303 = vadd.f32 %v1218, %v1302
    %v1304 = vpop.f32.mrb[0].mxu0
    %v1305 = vpop.f32.mrb[0].mxu0
    %1306 = vdwg.mxu0
    %v1307 = vadd.f32 %v1260, %v119
    %v1308 = vadd.f32 %v1262, %v123
    %v1309 = vadd.f32 %v1301, %v127
    %v1310 = vadd.f32 %v1303, %v131
    %v1311 = vxor.u32 %v1307, 2147483648
    %v1312 = vmul.f32 %v1311, 1.442695
    %v1313 = vpow.pop %v1312
    %v1314 = vadd.f32 %v1313, 1.0
    %v1315 = vrcp.pop %v1314
    %v1316 = vmul.f32 1.0, %v1315
    %v1317 = vxor.u32 %v1308, 2147483648
    %v1318 = vmul.f32 %v1317, 1.442695
    %v1319 = vpow.pop %v1318
    %v1320 = vadd.f32 %v1319, 1.0
    %v1321 = vrcp.pop %v1320
    %v1322 = vmul.f32 1.0, %v1321
    %v1323 = vtanh.pop %v1309
    %v1324 = vxor.u32 %v1310, 2147483648
    %v1325 = vmul.f32 %v1324, 1.442695
    %v1326 = vpow.pop %v1325
    %v1327 = vadd.f32 %v1326, 1.0
    %v1328 = vrcp.pop %v1327
    %v1329 = vmul.f32 1.0, %v1328
    %v1330 = vmul.f32 %v1322, %v1136
    %v1331 = vmul.f32 %v1316, %v1323
    %v1332 = vadd.f32 %v1330, %v1331
    %v1333 = vtanh.pop %v1332
    %v1334 = vmul.f32 %v1329, %v1333
    %1335 = vst [vmem:[#allocation2] sm:$0x3] %v1334
    %1336 = vst [vmem:[#allocation3] sm:$0x3] %v1332
    %v1337 = vpack.c.bf16 %v1334, %v1334
    %s1338 = scalar_lea.vmem [#allocation10], 4
    %1339 = vst [vmem:[%s1338] sm:$0x1] %v1337
    %v1340 = vld [vmem:[#allocation2] sm:$0x3]
    %v1341 = vld [vmem:[#allocation3] sm:$0x3]
    %s1342 = scalar_lea.vmem [#allocation4], 5
    %v1343 = vld [vmem:[%s1342] sm:$0x1]
    %v1344 = vpack.c.bf16 %v1340, %v1340
    %1345 = vmatprep.subr.bf16.mxu0 %v237
    %1346 = vmatpush1.bf16.msra.mxu0 %v236
    %1347 = vmatprep.subr.bf16.mxu0 %v241
    %1348 = vmatpush1.bf16.msra.mxu0 %v240
    %1349 = vmatprep.subr.bf16.mxu0 %v245
    %1350 = vmatpush1.bf16.msra.mxu0 %v244
    %1351 = vmatprep.subr.bf16.mxu0 %v249
    %1352 = vmatpush1.bf16.msra.mxu0 %v248
    %1353 = vmatprep.subr.bf16.mxu0 %v253
    %1354 = vmatpush1.bf16.msra.mxu0 %v252
    %1355 = vmatprep.subr.bf16.mxu0 %v257
    %1356 = vmatpush1.bf16.msra.mxu0 %v256
    %1357 = vmatprep.subr.bf16.mxu0 %v261
    %1358 = vmatpush1.bf16.msra.mxu0 %v260
    %1359 = vmatprep.subr.bf16.mxu0 %v265
    %1360 = vmatpush1.bf16.msra.mxu0 %v264
    %1361 = vmatprep.subr.bf16.mxu0 0
    %1362 = vmatpush1.bf16.msra.mxu0 0
    %1363 = vmatprep.subr.bf16.mxu0 0
    %1364 = vmatpush1.bf16.msra.mxu0 0
    %1365 = vmatprep.subr.bf16.mxu0 0
    %1366 = vmatpush1.bf16.msra.mxu0 0
    %1367 = vmatprep.subr.bf16.mxu0 0
    %1368 = vmatpush1.bf16.msra.mxu0 0
    %1369 = vmatprep.subr.bf16.mxu0 0
    %1370 = vmatpush1.bf16.msra.mxu0 0
    %1371 = vmatprep.subr.bf16.mxu0 0
    %1372 = vmatpush1.bf16.msra.mxu0 0
    %1373 = vmatprep.subr.bf16.mxu0 0
    %1374 = vmatpush1.bf16.msra.mxu0 0
    %1375 = vmatprep.subr.bf16.mxu0 0
    %1376 = vmatpush1.bf16.msra.mxu0 0
    %1377 = vmatprep.mubr.bf16.mxu0 0
    %1378 = vmatmul.mubr.bf16.gmra.mrb[0].mxu0 %v1344
    %v1379 = vpop.f32.mrb[0].mxu0
    %v1380 = vadd.f32 0.0, %v1379
    %v1381 = vpop.f32.mrb[0].mxu0
    %v1382 = vadd.f32 0.0, %v1381
    %v1383 = vpop.f32.mrb[0].mxu0
    %v1384 = vpop.f32.mrb[0].mxu0
    %1385 = vdwg.mxu0
    %1386 = vmatprep.subr.bf16.mxu0 %v239
    %1387 = vmatpush1.bf16.msra.mxu0 %v238
    %1388 = vmatprep.subr.bf16.mxu0 %v243
    %1389 = vmatpush1.bf16.msra.mxu0 %v242
    %1390 = vmatprep.subr.bf16.mxu0 %v247
    %1391 = vmatpush1.bf16.msra.mxu0 %v246
    %1392 = vmatprep.subr.bf16.mxu0 %v251
    %1393 = vmatpush1.bf16.msra.mxu0 %v250
    %1394 = vmatprep.subr.bf16.mxu0 %v255
    %1395 = vmatpush1.bf16.msra.mxu0 %v254
    %1396 = vmatprep.subr.bf16.mxu0 %v259
    %1397 = vmatpush1.bf16.msra.mxu0 %v258
    %1398 = vmatprep.subr.bf16.mxu0 %v263
    %1399 = vmatpush1.bf16.msra.mxu0 %v262
    %1400 = vmatprep.subr.bf16.mxu0 %v267
    %1401 = vmatpush1.bf16.msra.mxu0 %v266
    %1402 = vmatprep.subr.bf16.mxu0 0
    %1403 = vmatpush1.bf16.msra.mxu0 0
    %1404 = vmatprep.subr.bf16.mxu0 0
    %1405 = vmatpush1.bf16.msra.mxu0 0
    %1406 = vmatprep.subr.bf16.mxu0 0
    %1407 = vmatpush1.bf16.msra.mxu0 0
    %1408 = vmatprep.subr.bf16.mxu0 0
    %1409 = vmatpush1.bf16.msra.mxu0 0
    %1410 = vmatprep.subr.bf16.mxu0 0
    %1411 = vmatpush1.bf16.msra.mxu0 0
    %1412 = vmatprep.subr.bf16.mxu0 0
    %1413 = vmatpush1.bf16.msra.mxu0 0
    %1414 = vmatprep.subr.bf16.mxu0 0
    %1415 = vmatpush1.bf16.msra.mxu0 0
    %1416 = vmatprep.subr.bf16.mxu0 0
    %1417 = vmatpush1.bf16.msra.mxu0 0
    %1418 = vmatprep.mubr.bf16.mxu0 0
    %1419 = vmatmul.mubr.bf16.gmra.mrb[0].mxu0 %v1344
    %v1420 = vpop.f32.mrb[0].mxu0
    %v1421 = vadd.f32 0.0, %v1420
    %v1422 = vpop.f32.mrb[0].mxu0
    %v1423 = vadd.f32 0.0, %v1422
    %v1424 = vpop.f32.mrb[0].mxu0
    %v1425 = vpop.f32.mrb[0].mxu0
    %1426 = vdwg.mxu0
    %v1428 = vsel %vm402, %v1343, 0
    %1430 = vmatprep.subr.bf16.mxu0 %v395
    %1431 = vmatpush1.bf16.msra.mxu0 %v394
    %1432 = vmatprep.subr.bf16.mxu0 0
    %1433 = vmatpush1.bf16.msra.mxu0 0
    %1434 = vmatprep.subr.bf16.mxu0 0
    %1435 = vmatpush1.bf16.msra.mxu0 0
    %1436 = vmatprep.subr.bf16.mxu0 0
    %1437 = vmatpush1.bf16.msra.mxu0 0
    %1438 = vmatprep.subr.bf16.mxu0 0
    %1439 = vmatpush1.bf16.msra.mxu0 0
    %1440 = vmatprep.subr.bf16.mxu0 0
    %1441 = vmatpush1.bf16.msra.mxu0 0
    %1442 = vmatprep.subr.bf16.mxu0 0
    %1443 = vmatpush1.bf16.msra.mxu0 0
    %1444 = vmatprep.subr.bf16.mxu0 0
    %1445 = vmatpush1.bf16.msra.mxu0 0
    %1446 = vmatprep.subr.bf16.mxu0 0
    %1447 = vmatpush1.bf16.msra.mxu0 0
    %1448 = vmatprep.subr.bf16.mxu0 0
    %1449 = vmatpush1.bf16.msra.mxu0 0
    %1450 = vmatprep.subr.bf16.mxu0 0
    %1451 = vmatpush1.bf16.msra.mxu0 0
    %1452 = vmatprep.subr.bf16.mxu0 0
    %1453 = vmatpush1.bf16.msra.mxu0 0
    %1454 = vmatprep.subr.bf16.mxu0 0
    %1455 = vmatpush1.bf16.msra.mxu0 0
    %1456 = vmatprep.subr.bf16.mxu0 0
    %1457 = vmatpush1.bf16.msra.mxu0 0
    %1458 = vmatprep.subr.bf16.mxu0 0
    %1459 = vmatpush1.bf16.msra.mxu0 0
    %1460 = vmatprep.subr.bf16.mxu0 0
    %1461 = vmatpush1.bf16.msra.mxu0 0
    %1462 = vmatprep.mubr.bf16.mxu0 0
    %1463 = vmatmul.mubr.bf16.gmra.mrb[0].mxu0 %v1428
    %v1464 = vpop.f32.mrb[0].mxu0
    %v1465 = vadd.f32 %v1380, %v1464
    %v1466 = vpop.f32.mrb[0].mxu0
    %v1467 = vadd.f32 %v1382, %v1466
    %v1468 = vpop.f32.mrb[0].mxu0
    %v1469 = vpop.f32.mrb[0].mxu0
    %1470 = vdwg.mxu0
    %1471 = vmatprep.subr.bf16.mxu0 %v397
    %1472 = vmatpush1.bf16.msra.mxu0 %v396
    %1473 = vmatprep.subr.bf16.mxu0 0
    %1474 = vmatpush1.bf16.msra.mxu0 0
    %1475 = vmatprep.subr.bf16.mxu0 0
    %1476 = vmatpush1.bf16.msra.mxu0 0
    %1477 = vmatprep.subr.bf16.mxu0 0
    %1478 = vmatpush1.bf16.msra.mxu0 0
    %1479 = vmatprep.subr.bf16.mxu0 0
    %1480 = vmatpush1.bf16.msra.mxu0 0
    %1481 = vmatprep.subr.bf16.mxu0 0
    %1482 = vmatpush1.bf16.msra.mxu0 0
    %1483 = vmatprep.subr.bf16.mxu0 0
    %1484 = vmatpush1.bf16.msra.mxu0 0
    %1485 = vmatprep.subr.bf16.mxu0 0
    %1486 = vmatpush1.bf16.msra.mxu0 0
    %1487 = vmatprep.subr.bf16.mxu0 0
    %1488 = vmatpush1.bf16.msra.mxu0 0
    %1489 = vmatprep.subr.bf16.mxu0 0
    %1490 = vmatpush1.bf16.msra.mxu0 0
    %1491 = vmatprep.subr.bf16.mxu0 0
    %1492 = vmatpush1.bf16.msra.mxu0 0
    %1493 = vmatprep.subr.bf16.mxu0 0
    %1494 = vmatpush1.bf16.msra.mxu0 0
    %1495 = vmatprep.subr.bf16.mxu0 0
    %1496 = vmatpush1.bf16.msra.mxu0 0
    %1497 = vmatprep.subr.bf16.mxu0 0
    %1498 = vmatpush1.bf16.msra.mxu0 0
    %1499 = vmatprep.subr.bf16.mxu0 0
    %1500 = vmatpush1.bf16.msra.mxu0 0
    %1501 = vmatprep.subr.bf16.mxu0 0
    %1502 = vmatpush1.bf16.msra.mxu0 0
    %1503 = vmatprep.mubr.bf16.mxu0 0
    %1504 = vmatmul.mubr.bf16.gmra.mrb[0].mxu0 %v1428
    %v1505 = vpop.f32.mrb[0].mxu0
    %v1506 = vadd.f32 %v1421, %v1505
    %v1507 = vpop.f32.mrb[0].mxu0
    %v1508 = vadd.f32 %v1423, %v1507
    %v1509 = vpop.f32.mrb[0].mxu0
    %v1510 = vpop.f32.mrb[0].mxu0
    %1511 = vdwg.mxu0
    %v1512 = vadd.f32 %v1465, %v119
    %v1513 = vadd.f32 %v1467, %v123
    %v1514 = vadd.f32 %v1506, %v127
    %v1515 = vadd.f32 %v1508, %v131
    %v1516 = vxor.u32 %v1512, 2147483648
    %v1517 = vmul.f32 %v1516, 1.442695
    %v1518 = vpow.pop %v1517
    %v1519 = vadd.f32 %v1518, 1.0
    %v1520 = vrcp.pop %v1519
    %v1521 = vmul.f32 1.0, %v1520
    %v1522 = vxor.u32 %v1513, 2147483648
    %v1523 = vmul.f32 %v1522, 1.442695
    %v1524 = vpow.pop %v1523
    %v1525 = vadd.f32 %v1524, 1.0
    %v1526 = vrcp.pop %v1525
    %v1527 = vmul.f32 1.0, %v1526
    %v1528 = vtanh.pop %v1514
    %v1529 = vxor.u32 %v1515, 2147483648
    %v1530 = vmul.f32 %v1529, 1.442695
    %v1531 = vpow.pop %v1530
    %v1532 = vadd.f32 %v1531, 1.0
    %v1533 = vrcp.pop %v1532
    %v1534 = vmul.f32 1.0, %v1533
    %v1535 = vmul.f32 %v1527, %v1341
    %v1536 = vmul.f32 %v1521, %v1528
    %v1537 = vadd.f32 %v1535, %v1536
    %v1538 = vtanh.pop %v1537
    %v1539 = vmul.f32 %v1534, %v1538
    %1540 = vst [vmem:[#allocation2] sm:$0x3] %v1539
    %1541 = vst [vmem:[#allocation3] sm:$0x3] %v1537
    %v1542 = vpack.c.bf16 %v1539, %v1539
    %s1543 = scalar_lea.vmem [#allocation10], 5
    %1544 = vst [vmem:[%s1543] sm:$0x1] %v1542
    %v1545 = vld [vmem:[#allocation2] sm:$0x3]
    %v1546 = vld [vmem:[#allocation3] sm:$0x3]
    %s1547 = scalar_lea.vmem [#allocation4], 6
    %v1548 = vld [vmem:[%s1547] sm:$0x1]
    %v1549 = vpack.c.bf16 %v1545, %v1545
    %1550 = vmatprep.subr.bf16.mxu0 %v237
    %1551 = vmatpush1.bf16.msra.mxu0 %v236
    %1552 = vmatprep.subr.bf16.mxu0 %v241
    %1553 = vmatpush1.bf16.msra.mxu0 %v240
    %1554 = vmatprep.subr.bf16.mxu0 %v245
    %1555 = vmatpush1.bf16.msra.mxu0 %v244
    %1556 = vmatprep.subr.bf16.mxu0 %v249
    %1557 = vmatpush1.bf16.msra.mxu0 %v248
    %1558 = vmatprep.subr.bf16.mxu0 %v253
    %1559 = vmatpush1.bf16.msra.mxu0 %v252
    %1560 = vmatprep.subr.bf16.mxu0 %v257
    %1561 = vmatpush1.bf16.msra.mxu0 %v256
    %1562 = vmatprep.subr.bf16.mxu0 %v261
    %1563 = vmatpush1.bf16.msra.mxu0 %v260
    %1564 = vmatprep.subr.bf16.mxu0 %v265
    %1565 = vmatpush1.bf16.msra.mxu0 %v264
    %1566 = vmatprep.subr.bf16.mxu0 0
    %1567 = vmatpush1.bf16.msra.mxu0 0
    %1568 = vmatprep.subr.bf16.mxu0 0
    %1569 = vmatpush1.bf16.msra.mxu0 0
    %1570 = vmatprep.subr.bf16.mxu0 0
    %1571 = vmatpush1.bf16.msra.mxu0 0
    %1572 = vmatprep.subr.bf16.mxu0 0
    %1573 = vmatpush1.bf16.msra.mxu0 0
    %1574 = vmatprep.subr.bf16.mxu0 0
    %1575 = vmatpush1.bf16.msra.mxu0 0
    %1576 = vmatprep.subr.bf16.mxu0 0
    %1577 = vmatpush1.bf16.msra.mxu0 0
    %1578 = vmatprep.subr.bf16.mxu0 0
    %1579 = vmatpush1.bf16.msra.mxu0 0
    %1580 = vmatprep.subr.bf16.mxu0 0
    %1581 = vmatpush1.bf16.msra.mxu0 0
    %1582 = vmatprep.mubr.bf16.mxu0 0
    %1583 = vmatmul.mubr.bf16.gmra.mrb[0].mxu0 %v1549
    %v1584 = vpop.f32.mrb[0].mxu0
    %v1585 = vadd.f32 0.0, %v1584
    %v1586 = vpop.f32.mrb[0].mxu0
    %v1587 = vadd.f32 0.0, %v1586
    %v1588 = vpop.f32.mrb[0].mxu0
    %v1589 = vpop.f32.mrb[0].mxu0
    %1590 = vdwg.mxu0
    %1591 = vmatprep.subr.bf16.mxu0 %v239
    %1592 = vmatpush1.bf16.msra.mxu0 %v238
    %1593 = vmatprep.subr.bf16.mxu0 %v243
    %1594 = vmatpush1.bf16.msra.mxu0 %v242
    %1595 = vmatprep.subr.bf16.mxu0 %v247
    %1596 = vmatpush1.bf16.msra.mxu0 %v246
    %1597 = vmatprep.subr.bf16.mxu0 %v251
    %1598 = vmatpush1.bf16.msra.mxu0 %v250
    %1599 = vmatprep.subr.bf16.mxu0 %v255
    %1600 = vmatpush1.bf16.msra.mxu0 %v254
    %1601 = vmatprep.subr.bf16.mxu0 %v259
    %1602 = vmatpush1.bf16.msra.mxu0 %v258
    %1603 = vmatprep.subr.bf16.mxu0 %v263
    %1604 = vmatpush1.bf16.msra.mxu0 %v262
    %1605 = vmatprep.subr.bf16.mxu0 %v267
    %1606 = vmatpush1.bf16.msra.mxu0 %v266
    %1607 = vmatprep.subr.bf16.mxu0 0
    %1608 = vmatpush1.bf16.msra.mxu0 0
    %1609 = vmatprep.subr.bf16.mxu0 0
    %1610 = vmatpush1.bf16.msra.mxu0 0
    %1611 = vmatprep.subr.bf16.mxu0 0
    %1612 = vmatpush1.bf16.msra.mxu0 0
    %1613 = vmatprep.subr.bf16.mxu0 0
    %1614 = vmatpush1.bf16.msra.mxu0 0
    %1615 = vmatprep.subr.bf16.mxu0 0
    %1616 = vmatpush1.bf16.msra.mxu0 0
    %1617 = vmatprep.subr.bf16.mxu0 0
    %1618 = vmatpush1.bf16.msra.mxu0 0
    %1619 = vmatprep.subr.bf16.mxu0 0
    %1620 = vmatpush1.bf16.msra.mxu0 0
    %1621 = vmatprep.subr.bf16.mxu0 0
    %1622 = vmatpush1.bf16.msra.mxu0 0
    %1623 = vmatprep.mubr.bf16.mxu0 0
    %1624 = vmatmul.mubr.bf16.gmra.mrb[0].mxu0 %v1549
    %v1625 = vpop.f32.mrb[0].mxu0
    %v1626 = vadd.f32 0.0, %v1625
    %v1627 = vpop.f32.mrb[0].mxu0
    %v1628 = vadd.f32 0.0, %v1627
    %v1629 = vpop.f32.mrb[0].mxu0
    %v1630 = vpop.f32.mrb[0].mxu0
    %1631 = vdwg.mxu0
    %v1633 = vsel %vm402, %v1548, 0
    %1635 = vmatprep.subr.bf16.mxu0 %v395
    %1636 = vmatpush1.bf16.msra.mxu0 %v394
    %1637 = vmatprep.subr.bf16.mxu0 0
    %1638 = vmatpush1.bf16.msra.mxu0 0
    %1639 = vmatprep.subr.bf16.mxu0 0
    %1640 = vmatpush1.bf16.msra.mxu0 0
    %1641 = vmatprep.subr.bf16.mxu0 0
    %1642 = vmatpush1.bf16.msra.mxu0 0
    %1643 = vmatprep.subr.bf16.mxu0 0
    %1644 = vmatpush1.bf16.msra.mxu0 0
    %1645 = vmatprep.subr.bf16.mxu0 0
    %1646 = vmatpush1.bf16.msra.mxu0 0
    %1647 = vmatprep.subr.bf16.mxu0 0
    %1648 = vmatpush1.bf16.msra.mxu0 0
    %1649 = vmatprep.subr.bf16.mxu0 0
    %1650 = vmatpush1.bf16.msra.mxu0 0
    %1651 = vmatprep.subr.bf16.mxu0 0
    %1652 = vmatpush1.bf16.msra.mxu0 0
    %1653 = vmatprep.subr.bf16.mxu0 0
    %1654 = vmatpush1.bf16.msra.mxu0 0
    %1655 = vmatprep.subr.bf16.mxu0 0
    %1656 = vmatpush1.bf16.msra.mxu0 0
    %1657 = vmatprep.subr.bf16.mxu0 0
    %1658 = vmatpush1.bf16.msra.mxu0 0
    %1659 = vmatprep.subr.bf16.mxu0 0
    %1660 = vmatpush1.bf16.msra.mxu0 0
    %1661 = vmatprep.subr.bf16.mxu0 0
    %1662 = vmatpush1.bf16.msra.mxu0 0
    %1663 = vmatprep.subr.bf16.mxu0 0
    %1664 = vmatpush1.bf16.msra.mxu0 0
    %1665 = vmatprep.subr.bf16.mxu0 0
    %1666 = vmatpush1.bf16.msra.mxu0 0
    %1667 = vmatprep.mubr.bf16.mxu0 0
    %1668 = vmatmul.mubr.bf16.gmra.mrb[0].mxu0 %v1633
    %v1669 = vpop.f32.mrb[0].mxu0
    %v1670 = vadd.f32 %v1585, %v1669
    %v1671 = vpop.f32.mrb[0].mxu0
    %v1672 = vadd.f32 %v1587, %v1671
    %v1673 = vpop.f32.mrb[0].mxu0
    %v1674 = vpop.f32.mrb[0].mxu0
    %1675 = vdwg.mxu0
    %1676 = vmatprep.subr.bf16.mxu0 %v397
    %1677 = vmatpush1.bf16.msra.mxu0 %v396
    %1678 = vmatprep.subr.bf16.mxu0 0
    %1679 = vmatpush1.bf16.msra.mxu0 0
    %1680 = vmatprep.subr.bf16.mxu0 0
    %1681 = vmatpush1.bf16.msra.mxu0 0
    %1682 = vmatprep.subr.bf16.mxu0 0
    %1683 = vmatpush1.bf16.msra.mxu0 0
    %1684 = vmatprep.subr.bf16.mxu0 0
    %1685 = vmatpush1.bf16.msra.mxu0 0
    %1686 = vmatprep.subr.bf16.mxu0 0
    %1687 = vmatpush1.bf16.msra.mxu0 0
    %1688 = vmatprep.subr.bf16.mxu0 0
    %1689 = vmatpush1.bf16.msra.mxu0 0
    %1690 = vmatprep.subr.bf16.mxu0 0
    %1691 = vmatpush1.bf16.msra.mxu0 0
    %1692 = vmatprep.subr.bf16.mxu0 0
    %1693 = vmatpush1.bf16.msra.mxu0 0
    %1694 = vmatprep.subr.bf16.mxu0 0
    %1695 = vmatpush1.bf16.msra.mxu0 0
    %1696 = vmatprep.subr.bf16.mxu0 0
    %1697 = vmatpush1.bf16.msra.mxu0 0
    %1698 = vmatprep.subr.bf16.mxu0 0
    %1699 = vmatpush1.bf16.msra.mxu0 0
    %1700 = vmatprep.subr.bf16.mxu0 0
    %1701 = vmatpush1.bf16.msra.mxu0 0
    %1702 = vmatprep.subr.bf16.mxu0 0
    %1703 = vmatpush1.bf16.msra.mxu0 0
    %1704 = vmatprep.subr.bf16.mxu0 0
    %1705 = vmatpush1.bf16.msra.mxu0 0
    %1706 = vmatprep.subr.bf16.mxu0 0
    %1707 = vmatpush1.bf16.msra.mxu0 0
    %1708 = vmatprep.mubr.bf16.mxu0 0
    %1709 = vmatmul.mubr.bf16.gmra.mrb[0].mxu0 %v1633
    %v1710 = vpop.f32.mrb[0].mxu0
    %v1711 = vadd.f32 %v1626, %v1710
    %v1712 = vpop.f32.mrb[0].mxu0
    %v1713 = vadd.f32 %v1628, %v1712
    %v1714 = vpop.f32.mrb[0].mxu0
    %v1715 = vpop.f32.mrb[0].mxu0
    %1716 = vdwg.mxu0
    %v1717 = vadd.f32 %v1670, %v119
    %v1718 = vadd.f32 %v1672, %v123
    %v1719 = vadd.f32 %v1711, %v127
    %v1720 = vadd.f32 %v1713, %v131
    %v1721 = vxor.u32 %v1717, 2147483648
    %v1722 = vmul.f32 %v1721, 1.442695
    %v1723 = vpow.pop %v1722
    %v1724 = vadd.f32 %v1723, 1.0
    %v1725 = vrcp.pop %v1724
    %v1726 = vmul.f32 1.0, %v1725
    %v1727 = vxor.u32 %v1718, 2147483648
    %v1728 = vmul.f32 %v1727, 1.442695
    %v1729 = vpow.pop %v1728
    %v1730 = vadd.f32 %v1729, 1.0
    %v1731 = vrcp.pop %v1730
    %v1732 = vmul.f32 1.0, %v1731
    %v1733 = vtanh.pop %v1719
    %v1734 = vxor.u32 %v1720, 2147483648
    %v1735 = vmul.f32 %v1734, 1.442695
    %v1736 = vpow.pop %v1735
    %v1737 = vadd.f32 %v1736, 1.0
    %v1738 = vrcp.pop %v1737
    %v1739 = vmul.f32 1.0, %v1738
    %v1740 = vmul.f32 %v1732, %v1546
    %v1741 = vmul.f32 %v1726, %v1733
    %v1742 = vadd.f32 %v1740, %v1741
    %v1743 = vtanh.pop %v1742
    %v1744 = vmul.f32 %v1739, %v1743
    %1745 = vst [vmem:[#allocation2] sm:$0x3] %v1744
    %1746 = vst [vmem:[#allocation3] sm:$0x3] %v1742
    %v1747 = vpack.c.bf16 %v1744, %v1744
    %s1748 = scalar_lea.vmem [#allocation10], 6
    %1749 = vst [vmem:[%s1748] sm:$0x1] %v1747
    %v1750 = vld [vmem:[#allocation2] sm:$0x3]
    %v1751 = vld [vmem:[#allocation3] sm:$0x3]
    %s1752 = scalar_lea.vmem [#allocation4], 7
    %v1753 = vld [vmem:[%s1752] sm:$0x1]
    %v1754 = vpack.c.bf16 %v1750, %v1750
    %1755 = vmatprep.subr.bf16.mxu0 %v237
    %1756 = vmatpush1.bf16.msra.mxu0 %v236
    %1757 = vmatprep.subr.bf16.mxu0 %v241
    %1758 = vmatpush1.bf16.msra.mxu0 %v240
    %1759 = vmatprep.subr.bf16.mxu0 %v245
    %1760 = vmatpush1.bf16.msra.mxu0 %v244
    %1761 = vmatprep.subr.bf16.mxu0 %v249
    %1762 = vmatpush1.bf16.msra.mxu0 %v248
    %1763 = vmatprep.subr.bf16.mxu0 %v253
    %1764 = vmatpush1.bf16.msra.mxu0 %v252
    %1765 = vmatprep.subr.bf16.mxu0 %v257
    %1766 = vmatpush1.bf16.msra.mxu0 %v256
    %1767 = vmatprep.subr.bf16.mxu0 %v261
    %1768 = vmatpush1.bf16.msra.mxu0 %v260
    %1769 = vmatprep.subr.bf16.mxu0 %v265
    %1770 = vmatpush1.bf16.msra.mxu0 %v264
    %1771 = vmatprep.subr.bf16.mxu0 0
    %1772 = vmatpush1.bf16.msra.mxu0 0
    %1773 = vmatprep.subr.bf16.mxu0 0
    %1774 = vmatpush1.bf16.msra.mxu0 0
    %1775 = vmatprep.subr.bf16.mxu0 0
    %1776 = vmatpush1.bf16.msra.mxu0 0
    %1777 = vmatprep.subr.bf16.mxu0 0
    %1778 = vmatpush1.bf16.msra.mxu0 0
    %1779 = vmatprep.subr.bf16.mxu0 0
    %1780 = vmatpush1.bf16.msra.mxu0 0
    %1781 = vmatprep.subr.bf16.mxu0 0
    %1782 = vmatpush1.bf16.msra.mxu0 0
    %1783 = vmatprep.subr.bf16.mxu0 0
    %1784 = vmatpush1.bf16.msra.mxu0 0
    %1785 = vmatprep.subr.bf16.mxu0 0
    %1786 = vmatpush1.bf16.msra.mxu0 0
    %1787 = vmatprep.mubr.bf16.mxu0 0
    %1788 = vmatmul.mubr.bf16.gmra.mrb[0].mxu0 %v1754
    %v1789 = vpop.f32.mrb[0].mxu0
    %v1790 = vadd.f32 0.0, %v1789
    %v1791 = vpop.f32.mrb[0].mxu0
    %v1792 = vadd.f32 0.0, %v1791
    %v1793 = vpop.f32.mrb[0].mxu0
    %v1794 = vpop.f32.mrb[0].mxu0
    %1795 = vdwg.mxu0
    %1796 = vmatprep.subr.bf16.mxu0 %v239
    %1797 = vmatpush1.bf16.msra.mxu0 %v238
    %1798 = vmatprep.subr.bf16.mxu0 %v243
    %1799 = vmatpush1.bf16.msra.mxu0 %v242
    %1800 = vmatprep.subr.bf16.mxu0 %v247
    %1801 = vmatpush1.bf16.msra.mxu0 %v246
    %1802 = vmatprep.subr.bf16.mxu0 %v251
    %1803 = vmatpush1.bf16.msra.mxu0 %v250
    %1804 = vmatprep.subr.bf16.mxu0 %v255
    %1805 = vmatpush1.bf16.msra.mxu0 %v254
    %1806 = vmatprep.subr.bf16.mxu0 %v259
    %1807 = vmatpush1.bf16.msra.mxu0 %v258
    %1808 = vmatprep.subr.bf16.mxu0 %v263
    %1809 = vmatpush1.bf16.msra.mxu0 %v262
    %1810 = vmatprep.subr.bf16.mxu0 %v267
    %1811 = vmatpush1.bf16.msra.mxu0 %v266
    %1812 = vmatprep.subr.bf16.mxu0 0
    %1813 = vmatpush1.bf16.msra.mxu0 0
    %1814 = vmatprep.subr.bf16.mxu0 0
    %1815 = vmatpush1.bf16.msra.mxu0 0
    %1816 = vmatprep.subr.bf16.mxu0 0
    %1817 = vmatpush1.bf16.msra.mxu0 0
    %1818 = vmatprep.subr.bf16.mxu0 0
    %1819 = vmatpush1.bf16.msra.mxu0 0
    %1820 = vmatprep.subr.bf16.mxu0 0
    %1821 = vmatpush1.bf16.msra.mxu0 0
    %1822 = vmatprep.subr.bf16.mxu0 0
    %1823 = vmatpush1.bf16.msra.mxu0 0
    %1824 = vmatprep.subr.bf16.mxu0 0
    %1825 = vmatpush1.bf16.msra.mxu0 0
    %1826 = vmatprep.subr.bf16.mxu0 0
    %1827 = vmatpush1.bf16.msra.mxu0 0
    %1828 = vmatprep.mubr.bf16.mxu0 0
    %1829 = vmatmul.mubr.bf16.gmra.mrb[0].mxu0 %v1754
    %v1830 = vpop.f32.mrb[0].mxu0
    %v1831 = vadd.f32 0.0, %v1830
    %v1832 = vpop.f32.mrb[0].mxu0
    %v1833 = vadd.f32 0.0, %v1832
    %v1834 = vpop.f32.mrb[0].mxu0
    %v1835 = vpop.f32.mrb[0].mxu0
    %1836 = vdwg.mxu0
    %v1838 = vsel %vm402, %v1753, 0
    %1840 = vmatprep.subr.bf16.mxu0 %v395
    %1841 = vmatpush1.bf16.msra.mxu0 %v394
    %1842 = vmatprep.subr.bf16.mxu0 0
    %1843 = vmatpush1.bf16.msra.mxu0 0
    %1844 = vmatprep.subr.bf16.mxu0 0
    %1845 = vmatpush1.bf16.msra.mxu0 0
    %1846 = vmatprep.subr.bf16.mxu0 0
    %1847 = vmatpush1.bf16.msra.mxu0 0
    %1848 = vmatprep.subr.bf16.mxu0 0
    %1849 = vmatpush1.bf16.msra.mxu0 0
    %1850 = vmatprep.subr.bf16.mxu0 0
    %1851 = vmatpush1.bf16.msra.mxu0 0
    %1852 = vmatprep.subr.bf16.mxu0 0
    %1853 = vmatpush1.bf16.msra.mxu0 0
    %1854 = vmatprep.subr.bf16.mxu0 0
    %1855 = vmatpush1.bf16.msra.mxu0 0
    %1856 = vmatprep.subr.bf16.mxu0 0
    %1857 = vmatpush1.bf16.msra.mxu0 0
    %1858 = vmatprep.subr.bf16.mxu0 0
    %1859 = vmatpush1.bf16.msra.mxu0 0
    %1860 = vmatprep.subr.bf16.mxu0 0
    %1861 = vmatpush1.bf16.msra.mxu0 0
    %1862 = vmatprep.subr.bf16.mxu0 0
    %1863 = vmatpush1.bf16.msra.mxu0 0
    %1864 = vmatprep.subr.bf16.mxu0 0
    %1865 = vmatpush1.bf16.msra.mxu0 0
    %1866 = vmatprep.subr.bf16.mxu0 0
    %1867 = vmatpush1.bf16.msra.mxu0 0
    %1868 = vmatprep.subr.bf16.mxu0 0
    %1869 = vmatpush1.bf16.msra.mxu0 0
    %1870 = vmatprep.subr.bf16.mxu0 0
    %1871 = vmatpush1.bf16.msra.mxu0 0
    %1872 = vmatprep.mubr.bf16.mxu0 0
    %1873 = vmatmul.mubr.bf16.gmra.mrb[0].mxu0 %v1838
    %v1874 = vpop.f32.mrb[0].mxu0
    %v1875 = vadd.f32 %v1790, %v1874
    %v1876 = vpop.f32.mrb[0].mxu0
    %v1877 = vadd.f32 %v1792, %v1876
    %v1878 = vpop.f32.mrb[0].mxu0
    %v1879 = vpop.f32.mrb[0].mxu0
    %1880 = vdwg.mxu0
    %1881 = vmatprep.subr.bf16.mxu0 %v397
    %1882 = vmatpush1.bf16.msra.mxu0 %v396
    %1883 = vmatprep.subr.bf16.mxu0 0
    %1884 = vmatpush1.bf16.msra.mxu0 0
    %1885 = vmatprep.subr.bf16.mxu0 0
    %1886 = vmatpush1.bf16.msra.mxu0 0
    %1887 = vmatprep.subr.bf16.mxu0 0
    %1888 = vmatpush1.bf16.msra.mxu0 0
    %1889 = vmatprep.subr.bf16.mxu0 0
    %1890 = vmatpush1.bf16.msra.mxu0 0
    %1891 = vmatprep.subr.bf16.mxu0 0
    %1892 = vmatpush1.bf16.msra.mxu0 0
    %1893 = vmatprep.subr.bf16.mxu0 0
    %1894 = vmatpush1.bf16.msra.mxu0 0
    %1895 = vmatprep.subr.bf16.mxu0 0
    %1896 = vmatpush1.bf16.msra.mxu0 0
    %1897 = vmatprep.subr.bf16.mxu0 0
    %1898 = vmatpush1.bf16.msra.mxu0 0
    %1899 = vmatprep.subr.bf16.mxu0 0
    %1900 = vmatpush1.bf16.msra.mxu0 0
    %1901 = vmatprep.subr.bf16.mxu0 0
    %1902 = vmatpush1.bf16.msra.mxu0 0
    %1903 = vmatprep.subr.bf16.mxu0 0
    %1904 = vmatpush1.bf16.msra.mxu0 0
    %1905 = vmatprep.subr.bf16.mxu0 0
    %1906 = vmatpush1.bf16.msra.mxu0 0
    %1907 = vmatprep.subr.bf16.mxu0 0
    %1908 = vmatpush1.bf16.msra.mxu0 0
    %1909 = vmatprep.subr.bf16.mxu0 0
    %1910 = vmatpush1.bf16.msra.mxu0 0
    %1911 = vmatprep.subr.bf16.mxu0 0
    %1912 = vmatpush1.bf16.msra.mxu0 0
    %1913 = vmatprep.mubr.bf16.mxu0 0
    %1914 = vmatmul.mubr.bf16.gmra.mrb[0].mxu0 %v1838
    %v1915 = vpop.f32.mrb[0].mxu0
    %v1916 = vadd.f32 %v1831, %v1915
    %v1917 = vpop.f32.mrb[0].mxu0
    %v1918 = vadd.f32 %v1833, %v1917
    %v1919 = vpop.f32.mrb[0].mxu0
    %v1920 = vpop.f32.mrb[0].mxu0
    %1921 = vdwg.mxu0
    %v1922 = vadd.f32 %v1875, %v119
    %v1923 = vadd.f32 %v1877, %v123
    %v1924 = vadd.f32 %v1916, %v127
    %v1925 = vadd.f32 %v1918, %v131
    %v1926 = vxor.u32 %v1922, 2147483648
    %v1927 = vmul.f32 %v1926, 1.442695
    %v1928 = vpow.pop %v1927
    %v1929 = vadd.f32 %v1928, 1.0
    %v1930 = vrcp.pop %v1929
    %v1931 = vmul.f32 1.0, %v1930
    %v1932 = vxor.u32 %v1923, 2147483648
    %v1933 = vmul.f32 %v1932, 1.442695
    %v1934 = vpow.pop %v1933
    %v1935 = vadd.f32 %v1934, 1.0
    %v1936 = vrcp.pop %v1935
    %v1937 = vmul.f32 1.0, %v1936
    %v1938 = vtanh.pop %v1924
    %v1939 = vxor.u32 %v1925, 2147483648
    %v1940 = vmul.f32 %v1939, 1.442695
    %v1941 = vpow.pop %v1940
    %v1942 = vadd.f32 %v1941, 1.0
    %v1943 = vrcp.pop %v1942
    %v1944 = vmul.f32 1.0, %v1943
    %v1945 = vmul.f32 %v1937, %v1751
    %v1946 = vmul.f32 %v1931, %v1938
    %v1947 = vadd.f32 %v1945, %v1946
    %v1948 = vtanh.pop %v1947
    %v1949 = vmul.f32 %v1944, %v1948
    %1950 = vst [vmem:[#allocation2] sm:$0x3] %v1949
    %1951 = vst [vmem:[#allocation3] sm:$0x3] %v1947
    %v1952 = vpack.c.bf16 %v1949, %v1949
    %s1953 = scalar_lea.vmem [#allocation10], 7
    %1954 = vst [vmem:[%s1953] sm:$0x1] %v1952
    // Predicated region
    $region42: #{tpu_custom_call.1} parent=1 // pred_check
      %p1955 = pneg %p70
    $region43: #{tpu_custom_call.1} parent=1 // pred_check_branch
      %1957 = sbr.rel (%p1955) target = $region45
    $region44: #{tpu_custom_call.1} parent=1 // pred_region
      %v1958 = vld [vmem:[#allocation2] sm:$0x3]
      %1959 = vst [vmem:[#allocation11] sm:$0x3] %v1958
      %v1960 = vld [vmem:[#allocation3] sm:$0x3]
      %1961 = vst [vmem:[#allocation13] sm:$0x3] %v1960
    $region45: #{tpu_custom_call.1} parent=1 // pred_fallthru
      _
    // Predicated region
    $region46: #{tpu_custom_call.1} parent=1 // pred_check
      _
    $region47: #{tpu_custom_call.1} parent=1 // pred_check_branch
      %1963 = sbr.rel (0) target = $region49
    $region48: #{tpu_custom_call.1} parent=1 // pred_region
      %s1965 = ssub.s32 128, 128
      %1966 = vsyncadd [#allocation6], %s1965
      %s1967 = sshll.u32 [#allocation10], 4
      %s1968 = int_to_ptr.vmem [resolvable:$true] %s1967
      %1973 = dma.vmem_to_hbm [thread:$0]  %s1968, 128, %s6, [#allocation6], 16, 16, 1
    $region49: #{tpu_custom_call.1} parent=1 // pred_fallthru
      _
    // Predicated region
    $region50: #{tpu_custom_call.1} parent=1 // pred_check
      _
    $region51: #{tpu_custom_call.1} parent=1 // pred_check_branch
      %1975 = sbr.rel (0) target = $region53
    $region52: #{tpu_custom_call.1} parent=1 // pred_region
      %s1977 = ssub.s32 32, 32
      %1978 = vsyncadd [#allocation12], %s1977
      %s1980 = sshll.u32 [#allocation11], 4
      %s1981 = int_to_ptr.vmem [resolvable:$true] %s1980
      %1983 = dma.vmem_to_hbm [thread:$0]  %s1981, 32, %s7, [#allocation12]
    $region53: #{tpu_custom_call.1} parent=1 // pred_fallthru
      _
    // Predicated region
    $region54: #{tpu_custom_call.1} parent=1 // pred_check
      _
    $region55: #{tpu_custom_call.1} parent=1 // pred_check_branch
      %1985 = sbr.rel (0) target = $region57
    $region56: #{tpu_custom_call.1} parent=1 // pred_region
      %s1987 = ssub.s32 32, 32
      %1988 = vsyncadd [#allocation12], %s1987
      %s1990 = sshll.u32 [#allocation13], 4
      %s1991 = int_to_ptr.vmem [resolvable:$true] %s1990
      %1993 = dma.vmem_to_hbm [thread:$0]  %s1991, 32, %s8, [#allocation12]
    $region57: #{tpu_custom_call.1} parent=1 // pred_fallthru
      _
    // Predicated region
    $region58: #{tpu_custom_call.1} parent=1 // pred_check
      _
    $region59: #{tpu_custom_call.1} parent=1 // pred_check_branch
      %1995 = sbr.rel (0) target = $region61
    $region60: #{tpu_custom_call.1} parent=1 // pred_region
      %1996 = dma.done [#allocation6], 128
    $region61: #{tpu_custom_call.1} parent=1 // pred_fallthru
      _
    // Predicated region
    $region62: #{tpu_custom_call.1} parent=1 // pred_check
      _
    $region63: #{tpu_custom_call.1} parent=1 // pred_check_branch
      %1998 = sbr.rel (0) target = $region65
    $region64: #{tpu_custom_call.1} parent=1 // pred_region
      %1999 = dma.done [#allocation12], 32
    $region65: #{tpu_custom_call.1} parent=1 // pred_fallthru
      _
    // Predicated region
    $region66: #{tpu_custom_call.1} parent=1 // pred_check
      _
    $region67: #{tpu_custom_call.1} parent=1 // pred_check_branch
      %2001 = sbr.rel (0) target = $region69
    $region68: #{tpu_custom_call.1} parent=1 // pred_region
      %2002 = dma.done [#allocation12], 32
    $region69: #{tpu_custom_call.1} parent=1 // pred_fallthru
      _
    %2003 = vsyncpa [#allocation5], 1
    %2004 = vsyncpa [#allocation8], 1
    %2005 = vsyncpa [#allocation6], 1
    %2006 = vsyncpa [#allocation12], 1

</llo_original>
